<compile_context>
chip_gen: v7x
topology: tpu7x:2x2x1
jax: 0.10.0
libtpu: 0.0.40
codegen_flags: <defaults>
</compile_context>

<pallas_src>
import functools

import numpy as np
import jax
import jax.numpy as jnp
from jax.experimental import pallas as pl
from jax.experimental.pallas import tpu as pltpu

PAD = 0              # Constants.PAD
LN_EPS = 1e-5        # torch nn.LayerNorm default
NEG_INF = -1e30      # finite "minus infinity" (avoids NaN on fully-masked rows)


# ---------------------------------------------------------------- helpers ----
def _layernorm(x, gamma, beta):
    mu = jnp.mean(x, axis=-1, keepdims=True)
    var = jnp.mean((x - mu) ** 2, axis=-1, keepdims=True)
    return (x - mu) * jax.lax.rsqrt(var + LN_EPS) * gamma + beta


def _softmax(x):
    m = jnp.max(x, axis=-1, keepdims=True)
    e = jnp.exp(x - m)
    # divide on EUP (free slot) instead of VALU divide
    return e * pl.reciprocal(jnp.sum(e, axis=-1, keepdims=True), approx=True)


def _dotT(a, b):
    # a @ b.T without an explicit transpose (contract last dims).
    return jax.lax.dot_general(a, b, (((1,), (1,)), ((), ())),
                               preferred_element_type=jnp.float32)


def get_sinusoid_encoding_table(n_position, d_hid, padding_idx=None):
    position = np.arange(n_position, dtype=np.float64)[:, None]
    hid = np.arange(d_hid)[None, :]
    angle = position / np.power(10000.0, 2.0 * (hid // 2) / d_hid)
    table = np.zeros((n_position, d_hid), dtype=np.float64)
    table[:, 0::2] = np.sin(angle[:, 0::2])
    table[:, 1::2] = np.cos(angle[:, 1::2])
    if padding_idx is not None:
        table[padding_idx] = 0.0
    return jnp.asarray(table, dtype=jnp.float32)


# ------------------------------------------------ fused encoder-stack kernel --
def _encoder_stack_kernel(n_head, d_k, d_v, batch, seq_len,
                          x_ref, keypad_ref, nonpad_ref,
                          wq_ref, bq_ref, wk_ref, bk_ref, wv_ref, bv_ref,
                          wfc_ref, bfc_ref, g1_ref, b1_ref,
                          w1_ref, c1_ref, w2_ref, c2_ref, g2_ref, b2_ref,
                          o_ref):
    layer = pl.program_id(0)

    # Layer 0: seed the resident output block with the embedded input slab.
    @pl.when(layer == 0)
    def _():
        o_ref[...] = x_ref[...]

    x = o_ref[...]                         # (B*L, D) running activation
    nonpad = nonpad_ref[...]               # (B*L, 1)  1.0 = real token
    keypad = keypad_ref[...]               # (B, L)    1.0 = PAD key

    # --- MultiHeadAttention (self) ----------------------------------------
    q = jnp.dot(x, wq_ref[0], preferred_element_type=jnp.float32) + bq_ref[0]
    k = jnp.dot(x, wk_ref[0], preferred_element_type=jnp.float32) + bk_ref[0]
    v = jnp.dot(x, wv_ref[0], preferred_element_type=jnp.float32) + bv_ref[0]

    inv_temp = 1.0 / (float(d_k) ** 0.5)
    L = seq_len
    per_batch = []
    for b in range(batch):                 # static, fully unrolled
        qb = q[b * L:(b + 1) * L, :]
        kb = k[b * L:(b + 1) * L, :]
        vb = v[b * L:(b + 1) * L, :]
        mb = keypad[b:b + 1, :]            # (1, L) broadcasts over query rows
        heads = []
        for h in range(n_head):            # static head loop
            qh = qb[:, h * d_k:(h + 1) * d_k]
            kh = kb[:, h * d_k:(h + 1) * d_k]
            vh = vb[:, h * d_v:(h + 1) * d_v]
            s = _dotT(qh, kh) * inv_temp                  # (L, L)
            s = jnp.where(mb > 0.0, NEG_INF, s)
            p = _softmax(s)
            heads.append(jnp.dot(p, vh, preferred_element_type=jnp.float32))
        per_batch.append(jnp.concatenate(heads, axis=-1))
    attn_heads = jnp.concatenate(per_batch, axis=0)       # (B*L, n_head*d_v)

    # single fc projection over all heads
    attn = (jnp.dot(attn_heads, wfc_ref[0], preferred_element_type=jnp.float32)
            + bfc_ref[0])
    attn = _layernorm(attn + x, g1_ref[0], b1_ref[0])
    attn = attn * nonpad                                  # enc_output *= non_pad_mask

    # --- PositionwiseFeedForward (Conv1d k=1 pair == dense matmuls) --------
    h1 = jnp.dot(attn, w1_ref[0], preferred_element_type=jnp.float32) + c1_ref[0]
    h1 = jnp.maximum(h1, 0.0)
    y = jnp.dot(h1, w2_ref[0], preferred_element_type=jnp.float32) + c2_ref[0]
    y = _layernorm(y + attn, g2_ref[0], b2_ref[0])
    y = y * nonpad                                        # enc_output *= non_pad_mask

    o_ref[...] = y


PARAM_NAMES = ("wq", "bq", "wk", "bk", "wv", "bv", "wfc", "bfc",
               "g1", "b1", "w1", "c1", "w2", "c2", "g2", "b2")


def encoder_stack(x2d, keypad, nonpad, stack, batch, seq_len, n_head, d_k, d_v):
    n_layers = stack["wq"].shape[0]
    BL, D = x2d.shape
    stacked = [stack[n] for n in PARAM_NAMES]

    def layer_spec(a):
        nd = a.ndim
        return pl.BlockSpec((1,) + a.shape[1:],
                            lambda l, _nd=nd: (l,) + (0,) * (_nd - 1))

    in_specs = [
        pl.BlockSpec((BL, D), lambda l: (0, 0)),          # input slab (read once)
        pl.BlockSpec(keypad.shape, lambda l: (0, 0)),     # (B, L) key-pad mask
        pl.BlockSpec(nonpad.shape, lambda l: (0, 0)),     # (B*L, 1) non-pad mask
    ] + [layer_spec(a) for a in stacked]

    kernel = functools.partial(_encoder_stack_kernel, n_head, d_k, d_v,
                               batch, seq_len)
    return pl.pallas_call(
        kernel,
        out_shape=jax.ShapeDtypeStruct((BL, D), jnp.float32),
        grid=(n_layers,),
        in_specs=in_specs,
        out_specs=pl.BlockSpec((BL, D), lambda l: (0, 0)),  # resident carry
        compiler_params=pltpu.CompilerParams(
            dimension_semantics=("arbitrary",)),            # layers are sequential
    )(x2d, keypad, nonpad, *stacked)


# --------------------------------------------------------------- full model ---
def encoder_forward(params, src_seq, src_pos, n_head, d_k, d_v):
    """Encoder.forward(src_seq, src_pos) -> enc_output  (return_attns=False)."""
    # TODO(synk): return_attns=True path (per-layer attention maps) not returned.
    B, L = src_seq.shape
    D = params["embedding"].shape[1]

    keypad = (src_seq == PAD).astype(jnp.float32)                   # (B, L)
    nonpad = (src_seq != PAD).astype(jnp.float32).reshape(B * L, 1) # (B*L, 1)

    # embedding + positional encoding (gathers: plain-JAX glue)
    x = (jnp.take(params["embedding"], src_seq, axis=0)
         + jnp.take(params["pos_table"], src_pos, axis=0))          # (B, L, D)

    out2d = encoder_stack(x.reshape(B * L, D), keypad, nonpad,
                          params["stack"], B, L, n_head, d_k, d_v)
    return out2d.reshape(B, L, D)


# -------------------------------------------------------- deterministic init --
def init_params(key, vocab_size, n_position, d_model, d_inner,
                n_layers, n_head, d_k, d_v):
    it = iter(jax.random.split(key, 16))

    def w(shape, scale=0.05):
        return jax.random.normal(next(it), shape, jnp.float32) * scale

    embedding = w((vocab_size, d_model), 0.1).at[PAD].set(0.0)  # padding_idx row
    stack = dict(
        wq=w((n_layers, d_model, n_head * d_k)),
        bq=w((n_layers, 1, n_head * d_k)),
        wk=w((n_layers, d_model, n_head * d_k)),
        bk=w((n_layers, 1, n_head * d_k)),
        wv=w((n_layers, d_model, n_head * d_v)),
        bv=w((n_layers, 1, n_head * d_v)),
        wfc=w((n_layers, n_head * d_v, d_model)),
        bfc=w((n_layers, 1, d_model)),
        g1=jnp.ones((n_layers, 1, d_model), jnp.float32),
        b1=jnp.zeros((n_layers, 1, d_model), jnp.float32),
        w1=w((n_layers, d_model, d_inner)),
        c1=w((n_layers, 1, d_inner)),
        w2=w((n_layers, d_inner, d_model)),
        c2=w((n_layers, 1, d_model)),
        g2=jnp.ones((n_layers, 1, d_model), jnp.float32),
        b2=jnp.zeros((n_layers, 1, d_model), jnp.float32),
    )
    pos_table = get_sinusoid_encoding_table(n_position, d_model, padding_idx=0)
    return dict(embedding=embedding, pos_table=pos_table, stack=stack)


# -------------------------------------------------------------------- main ----
if __name__ == "__main__":
    key = jax.random.PRNGKey(0)
    B, L = 2, 16
    vocab = 50
    d_model, d_inner = 32, 64
    n_layers, n_head, d_k, d_v = 2, 2, 16, 16
    len_max_seq = L

    k_p, k_s = jax.random.split(key, 2)
    params = init_params(k_p, vocab, len_max_seq + 1, d_model, d_inner,
                         n_layers, n_head, d_k, d_v)

    src_seq = jax.random.randint(k_s, (B, L), 1, vocab)
    src_seq = src_seq.at[1, -3:].set(PAD)                  # some key padding
    positions = jnp.broadcast_to(jnp.arange(1, L + 1), (B, L))
    src_pos = jnp.where(src_seq != PAD, positions, 0).astype(jnp.int32)

    fwd = jax.jit(functools.partial(encoder_forward,
                                    n_head=n_head, d_k=d_k, d_v=d_v))
    out = fwd(params, src_seq, src_pos)
    jax.block_until_ready(out)

    assert out.shape == (B, L, d_model)
    assert not bool(jnp.any(jnp.isnan(out)))
    # padded positions must be zeroed by the non-pad mask
    assert bool(jnp.all(jnp.abs(out[1, -3:, :]) == 0.0))
    print("KERNEL_OK")
</pallas_src>

<mosaic_0001>
module attributes {stable_mosaic.version = 11 : i64} {
  func.func @_encoder_stack_kernel(%arg0: i32, %arg1: memref<32x32xf32, #tpu.memory_space<vmem>>, %arg2: memref<2x16xf32, #tpu.memory_space<vmem>>, %arg3: memref<32x1xf32, #tpu.memory_space<vmem>>, %arg4: memref<1x32x32xf32, #tpu.memory_space<vmem>>, %arg5: memref<1x1x32xf32, #tpu.memory_space<vmem>>, %arg6: memref<1x32x32xf32, #tpu.memory_space<vmem>>, %arg7: memref<1x1x32xf32, #tpu.memory_space<vmem>>, %arg8: memref<1x32x32xf32, #tpu.memory_space<vmem>>, %arg9: memref<1x1x32xf32, #tpu.memory_space<vmem>>, %arg10: memref<1x32x32xf32, #tpu.memory_space<vmem>>, %arg11: memref<1x1x32xf32, #tpu.memory_space<vmem>>, %arg12: memref<1x1x32xf32, #tpu.memory_space<vmem>>, %arg13: memref<1x1x32xf32, #tpu.memory_space<vmem>>, %arg14: memref<1x32x64xf32, #tpu.memory_space<vmem>>, %arg15: memref<1x1x64xf32, #tpu.memory_space<vmem>>, %arg16: memref<1x64x32xf32, #tpu.memory_space<vmem>>, %arg17: memref<1x1x32xf32, #tpu.memory_space<vmem>>, %arg18: memref<1x1x32xf32, #tpu.memory_space<vmem>>, %arg19: memref<1x1x32xf32, #tpu.memory_space<vmem>>, %arg20: memref<32x32xf32, #tpu.memory_space<vmem>>) attributes {dimension_semantics = [#tpu.dimension_semantics<arbitrary>], iteration_bounds = array<i64: 2>, scalar_prefetch = 0 : i64, scratch_operands = 0 : i64, tpu.core_type = #tpu.core_type<tc>, window_params = [{pipeline_mode = #tpu.pipeline_mode<synchronous>, transform_indices = @transform_0, window_bounds = array<i64: 32, 32>}, {pipeline_mode = #tpu.pipeline_mode<synchronous>, transform_indices = @transform_1, window_bounds = array<i64: 2, 16>}, {pipeline_mode = #tpu.pipeline_mode<synchronous>, transform_indices = @transform_2, window_bounds = array<i64: 32, 1>}, {transform_indices = @transform_3, window_bounds = array<i64: 1, 32, 32>}, {transform_indices = @transform_4, window_bounds = array<i64: 1, 1, 32>}, {transform_indices = @transform_5, window_bounds = array<i64: 1, 32, 32>}, {transform_indices = @transform_6, window_bounds = array<i64: 1, 1, 32>}, {transform_indices = @transform_7, window_bounds = array<i64: 1, 32, 32>}, {transform_indices = @transform_8, window_bounds = array<i64: 1, 1, 32>}, {transform_indices = @transform_9, window_bounds = array<i64: 1, 32, 32>}, {transform_indices = @transform_10, window_bounds = array<i64: 1, 1, 32>}, {transform_indices = @transform_11, window_bounds = array<i64: 1, 1, 32>}, {transform_indices = @transform_12, window_bounds = array<i64: 1, 1, 32>}, {transform_indices = @transform_13, window_bounds = array<i64: 1, 32, 64>}, {transform_indices = @transform_14, window_bounds = array<i64: 1, 1, 64>}, {transform_indices = @transform_15, window_bounds = array<i64: 1, 64, 32>}, {transform_indices = @transform_16, window_bounds = array<i64: 1, 1, 32>}, {transform_indices = @transform_17, window_bounds = array<i64: 1, 1, 32>}, {transform_indices = @transform_18, window_bounds = array<i64: 1, 1, 32>}, {pipeline_mode = #tpu.pipeline_mode<synchronous>, transform_indices = @transform_19, window_bounds = array<i64: 32, 32>}]} {
    %c0_i32 = arith.constant 0 : i32
    %0 = arith.cmpi eq, %arg0, %c0_i32 : i32
    %1 = arith.extui %0 : i1 to i32
    %c0_i32_0 = arith.constant 0 : i32
    %2 = arith.cmpi ne, %1, %c0_i32_0 : i32
    scf.if %2 {
      %c0_100 = arith.constant 0 : index
      %c0_101 = arith.constant 0 : index
      %212 = vector.load %arg1[%c0_100, %c0_101] : memref<32x32xf32, #tpu.memory_space<vmem>>, vector<32x32xf32>
      %c0_102 = arith.constant 0 : index
      %c0_103 = arith.constant 0 : index
      %213 = vector.load %arg20[%c0_102, %c0_103] : memref<32x32xf32, #tpu.memory_space<vmem>>, vector<32x32xf32>
      tpu.vector_store %arg20[%c0_102, %c0_103], %212 {strides = array<i32>} : memref<32x32xf32, #tpu.memory_space<vmem>>, vector<32x32xf32>,
    } else {
    }
    %c0 = arith.constant 0 : index
    %c0_1 = arith.constant 0 : index
    %3 = vector.load %arg20[%c0, %c0_1] : memref<32x32xf32, #tpu.memory_space<vmem>>, vector<32x32xf32>
    %c0_2 = arith.constant 0 : index
    %c0_3 = arith.constant 0 : index
    %4 = vector.load %arg3[%c0_2, %c0_3] : memref<32x1xf32, #tpu.memory_space<vmem>>, vector<32x1xf32>
    %c0_4 = arith.constant 0 : index
    %c0_5 = arith.constant 0 : index
    %5 = vector.load %arg2[%c0_4, %c0_5] : memref<2x16xf32, #tpu.memory_space<vmem>>, vector<2x16xf32>
    %c0_6 = arith.constant 0 : index
    %c0_7 = arith.constant 0 : index
    %c0_8 = arith.constant 0 : index
    %6 = vector.load %arg4[%c0_6, %c0_7, %c0_8] : memref<1x32x32xf32, #tpu.memory_space<vmem>>, vector<1x32x32xf32>
    %7 = vector.shape_cast %6 : vector<1x32x32xf32> to vector<32x32xf32>
    %cst = arith.constant dense<0.000000e+00> : vector<32x32xf32>
    %8 = tpu.matmul %3, %7, %cst {dimension_numbers = #tpu.dot_dimension_numbers<[1], [0], [0], [1], [0, 0, 1, 1], [], []>} : vector<32x32xf32>, vector<32x32xf32>, vector<32x32xf32> -> vector<32x32xf32>
    %c0_9 = arith.constant 0 : index
    %c0_10 = arith.constant 0 : index
    %c0_11 = arith.constant 0 : index
    %9 = vector.load %arg5[%c0_9, %c0_10, %c0_11] : memref<1x1x32xf32, #tpu.memory_space<vmem>>, vector<1x1x32xf32>
    %10 = vector.shape_cast %9 : vector<1x1x32xf32> to vector<1x32xf32>
    %11 = vector.broadcast %10 : vector<1x32xf32> to vector<32x32xf32>
    %12 = arith.addf %8, %11 : vector<32x32xf32>
    %c0_12 = arith.constant 0 : index
    %c0_13 = arith.constant 0 : index
    %c0_14 = arith.constant 0 : index
    %13 = vector.load %arg6[%c0_12, %c0_13, %c0_14] : memref<1x32x32xf32, #tpu.memory_space<vmem>>, vector<1x32x32xf32>
    %14 = vector.shape_cast %13 : vector<1x32x32xf32> to vector<32x32xf32>
    %cst_15 = arith.constant dense<0.000000e+00> : vector<32x32xf32>
    %15 = tpu.matmul %3, %14, %cst_15 {dimension_numbers = #tpu.dot_dimension_numbers<[1], [0], [0], [1], [0, 0, 1, 1], [], []>} : vector<32x32xf32>, vector<32x32xf32>, vector<32x32xf32> -> vector<32x32xf32>
    %c0_16 = arith.constant 0 : index
    %c0_17 = arith.constant 0 : index
    %c0_18 = arith.constant 0 : index
    %16 = vector.load %arg7[%c0_16, %c0_17, %c0_18] : memref<1x1x32xf32, #tpu.memory_space<vmem>>, vector<1x1x32xf32>
    %17 = vector.shape_cast %16 : vector<1x1x32xf32> to vector<1x32xf32>
    %18 = vector.broadcast %17 : vector<1x32xf32> to vector<32x32xf32>
    %19 = arith.addf %15, %18 : vector<32x32xf32>
    %c0_19 = arith.constant 0 : index
    %c0_20 = arith.constant 0 : index
    %c0_21 = arith.constant 0 : index
    %20 = vector.load %arg8[%c0_19, %c0_20, %c0_21] : memref<1x32x32xf32, #tpu.memory_space<vmem>>, vector<1x32x32xf32>
    %21 = vector.shape_cast %20 : vector<1x32x32xf32> to vector<32x32xf32>
    %cst_22 = arith.constant dense<0.000000e+00> : vector<32x32xf32>
    %22 = tpu.matmul %3, %21, %cst_22 {dimension_numbers = #tpu.dot_dimension_numbers<[1], [0], [0], [1], [0, 0, 1, 1], [], []>} : vector<32x32xf32>, vector<32x32xf32>, vector<32x32xf32> -> vector<32x32xf32>
    %c0_23 = arith.constant 0 : index
    %c0_24 = arith.constant 0 : index
    %c0_25 = arith.constant 0 : index
    %23 = vector.load %arg9[%c0_23, %c0_24, %c0_25] : memref<1x1x32xf32, #tpu.memory_space<vmem>>, vector<1x1x32xf32>
    %24 = vector.shape_cast %23 : vector<1x1x32xf32> to vector<1x32xf32>
    %25 = vector.broadcast %24 : vector<1x32xf32> to vector<32x32xf32>
    %26 = arith.addf %22, %25 : vector<32x32xf32>
    %27 = vector.extract_strided_slice %12 {offsets = [0, 0], sizes = [16, 32], strides = [1, 1]} : vector<32x32xf32> to vector<16x32xf32>
    %28 = vector.extract_strided_slice %19 {offsets = [0, 0], sizes = [16, 32], strides = [1, 1]} : vector<32x32xf32> to vector<16x32xf32>
    %29 = vector.extract_strided_slice %26 {offsets = [0, 0], sizes = [16, 32], strides = [1, 1]} : vector<32x32xf32> to vector<16x32xf32>
    %30 = vector.extract_strided_slice %5 {offsets = [0, 0], sizes = [1, 16], strides = [1, 1]} : vector<2x16xf32> to vector<1x16xf32>
    %31 = vector.extract_strided_slice %27 {offsets = [0, 0], sizes = [16, 16], strides = [1, 1]} : vector<16x32xf32> to vector<16x16xf32>
    %32 = vector.extract_strided_slice %28 {offsets = [0, 0], sizes = [16, 16], strides = [1, 1]} : vector<16x32xf32> to vector<16x16xf32>
    %33 = vector.extract_strided_slice %29 {offsets = [0, 0], sizes = [16, 16], strides = [1, 1]} : vector<16x32xf32> to vector<16x16xf32>
    %cst_26 = arith.constant dense<0.000000e+00> : vector<16x16xf32>
    %34 = tpu.matmul %31, %32, %cst_26 {dimension_numbers = #tpu.dot_dimension_numbers<[1], [1], [0], [0], [0, 0, 1, 0], [], []>} : vector<16x16xf32>, vector<16x16xf32>, vector<16x16xf32> -> vector<16x16xf32>
    %cst_27 = arith.constant 2.500000e-01 : f32
    %35 = vector.broadcast %cst_27 : f32 to vector<16x16xf32>
    %36 = arith.mulf %34, %35 : vector<16x16xf32>
    %cst_28 = arith.constant 0.000000e+00 : f32
    %37 = vector.broadcast %cst_28 : f32 to vector<1x16xf32>
    %38 = arith.cmpf ogt, %30, %37 : vector<1x16xf32>
    %cst_29 = arith.constant -1.000000e+30 : f32
    %39 = vector.shape_cast %38 : vector<1x16xi1> to vector<1x16xi1>
    %40 = vector.broadcast %39 : vector<1x16xi1> to vector<16x16xi1>
    %41 = vector.broadcast %cst_29 : f32 to vector<16x16xf32>
    %42 = arith.select %40, %41, %36 : vector<16x16xi1>, vector<16x16xf32>
    %cst_30 = arith.constant dense<0xFF800000> : vector<16xf32>
    %43 = vector.multi_reduction <maximumf>, %42, %cst_30 [1] : vector<16x16xf32> to vector<16xf32>
    %44 = vector.shape_cast %43 : vector<16xf32> to vector<16x1xf32>
    %45 = vector.broadcast %44 : vector<16x1xf32> to vector<16x16xf32>
    %46 = arith.subf %42, %45 : vector<16x16xf32>
    %47 = math.exp %46 : vector<16x16xf32>
    %cst_31 = arith.constant dense<0.000000e+00> : vector<16xf32>
    %48 = vector.multi_reduction <add>, %47, %cst_31 [1] : vector<16x16xf32> to vector<16xf32>
    %49 = vector.shape_cast %48 : vector<16xf32> to vector<16x1xf32>
    %50 = tpu.reciprocal %49 {approx = true} : vector<16x1xf32> -> vector<16x1xf32>
    %51 = vector.broadcast %50 : vector<16x1xf32> to vector<16x16xf32>
    %52 = arith.mulf %47, %51 : vector<16x16xf32>
    %cst_32 = arith.constant dense<0.000000e+00> : vector<16x16xf32>
    %53 = tpu.matmul %52, %33, %cst_32 {dimension_numbers = #tpu.dot_dimension_numbers<[1], [0], [0], [1], [0, 0, 1, 1], [], []>} : vector<16x16xf32>, vector<16x16xf32>, vector<16x16xf32> -> vector<16x16xf32>
    %54 = vector.extract_strided_slice %27 {offsets = [0, 16], sizes = [16, 16], strides = [1, 1]} : vector<16x32xf32> to vector<16x16xf32>
    %55 = vector.extract_strided_slice %28 {offsets = [0, 16], sizes = [16, 16], strides = [1, 1]} : vector<16x32xf32> to vector<16x16xf32>
    %56 = vector.extract_strided_slice %29 {offsets = [0, 16], sizes = [16, 16], strides = [1, 1]} : vector<16x32xf32> to vector<16x16xf32>
    %cst_33 = arith.constant dense<0.000000e+00> : vector<16x16xf32>
    %57 = tpu.matmul %54, %55, %cst_33 {dimension_numbers = #tpu.dot_dimension_numbers<[1], [1], [0], [0], [0, 0, 1, 0], [], []>} : vector<16x16xf32>, vector<16x16xf32>, vector<16x16xf32> -> vector<16x16xf32>
    %cst_34 = arith.constant 2.500000e-01 : f32
    %58 = vector.broadcast %cst_34 : f32 to vector<16x16xf32>
    %59 = arith.mulf %57, %58 : vector<16x16xf32>
    %cst_35 = arith.constant 0.000000e+00 : f32
    %60 = vector.broadcast %cst_35 : f32 to vector<1x16xf32>
    %61 = arith.cmpf ogt, %30, %60 : vector<1x16xf32>
    %cst_36 = arith.constant -1.000000e+30 : f32
    %62 = vector.shape_cast %61 : vector<1x16xi1> to vector<1x16xi1>
    %63 = vector.broadcast %62 : vector<1x16xi1> to vector<16x16xi1>
    %64 = vector.broadcast %cst_36 : f32 to vector<16x16xf32>
    %65 = arith.select %63, %64, %59 : vector<16x16xi1>, vector<16x16xf32>
    %cst_37 = arith.constant dense<0xFF800000> : vector<16xf32>
    %66 = vector.multi_reduction <maximumf>, %65, %cst_37 [1] : vector<16x16xf32> to vector<16xf32>
    %67 = vector.shape_cast %66 : vector<16xf32> to vector<16x1xf32>
    %68 = vector.broadcast %67 : vector<16x1xf32> to vector<16x16xf32>
    %69 = arith.subf %65, %68 : vector<16x16xf32>
    %70 = math.exp %69 : vector<16x16xf32>
    %cst_38 = arith.constant dense<0.000000e+00> : vector<16xf32>
    %71 = vector.multi_reduction <add>, %70, %cst_38 [1] : vector<16x16xf32> to vector<16xf32>
    %72 = vector.shape_cast %71 : vector<16xf32> to vector<16x1xf32>
    %73 = tpu.reciprocal %72 {approx = true} : vector<16x1xf32> -> vector<16x1xf32>
    %74 = vector.broadcast %73 : vector<16x1xf32> to vector<16x16xf32>
    %75 = arith.mulf %70, %74 : vector<16x16xf32>
    %cst_39 = arith.constant dense<0.000000e+00> : vector<16x16xf32>
    %76 = tpu.matmul %75, %56, %cst_39 {dimension_numbers = #tpu.dot_dimension_numbers<[1], [0], [0], [1], [0, 0, 1, 1], [], []>} : vector<16x16xf32>, vector<16x16xf32>, vector<16x16xf32> -> vector<16x16xf32>
    %77 = tpu.concatenate %53, %76 in 1 : vector<16x16xf32>, vector<16x16xf32> -> vector<16x32xf32>
    %78 = vector.extract_strided_slice %12 {offsets = [16, 0], sizes = [16, 32], strides = [1, 1]} : vector<32x32xf32> to vector<16x32xf32>
    %79 = vector.extract_strided_slice %19 {offsets = [16, 0], sizes = [16, 32], strides = [1, 1]} : vector<32x32xf32> to vector<16x32xf32>
    %80 = vector.extract_strided_slice %26 {offsets = [16, 0], sizes = [16, 32], strides = [1, 1]} : vector<32x32xf32> to vector<16x32xf32>
    %81 = vector.extract_strided_slice %5 {offsets = [1, 0], sizes = [1, 16], strides = [1, 1]} : vector<2x16xf32> to vector<1x16xf32>
    %82 = vector.extract_strided_slice %78 {offsets = [0, 0], sizes = [16, 16], strides = [1, 1]} : vector<16x32xf32> to vector<16x16xf32>
    %83 = vector.extract_strided_slice %79 {offsets = [0, 0], sizes = [16, 16], strides = [1, 1]} : vector<16x32xf32> to vector<16x16xf32>
    %84 = vector.extract_strided_slice %80 {offsets = [0, 0], sizes = [16, 16], strides = [1, 1]} : vector<16x32xf32> to vector<16x16xf32>
    %cst_40 = arith.constant dense<0.000000e+00> : vector<16x16xf32>
    %85 = tpu.matmul %82, %83, %cst_40 {dimension_numbers = #tpu.dot_dimension_numbers<[1], [1], [0], [0], [0, 0, 1, 0], [], []>} : vector<16x16xf32>, vector<16x16xf32>, vector<16x16xf32> -> vector<16x16xf32>
    %cst_41 = arith.constant 2.500000e-01 : f32
    %86 = vector.broadcast %cst_41 : f32 to vector<16x16xf32>
    %87 = arith.mulf %85, %86 : vector<16x16xf32>
    %cst_42 = arith.constant 0.000000e+00 : f32
    %88 = vector.broadcast %cst_42 : f32 to vector<1x16xf32>
    %89 = arith.cmpf ogt, %81, %88 : vector<1x16xf32>
    %cst_43 = arith.constant -1.000000e+30 : f32
    %90 = vector.shape_cast %89 : vector<1x16xi1> to vector<1x16xi1>
    %91 = vector.broadcast %90 : vector<1x16xi1> to vector<16x16xi1>
    %92 = vector.broadcast %cst_43 : f32 to vector<16x16xf32>
    %93 = arith.select %91, %92, %87 : vector<16x16xi1>, vector<16x16xf32>
    %cst_44 = arith.constant dense<0xFF800000> : vector<16xf32>
    %94 = vector.multi_reduction <maximumf>, %93, %cst_44 [1] : vector<16x16xf32> to vector<16xf32>
    %95 = vector.shape_cast %94 : vector<16xf32> to vector<16x1xf32>
    %96 = vector.broadcast %95 : vector<16x1xf32> to vector<16x16xf32>
    %97 = arith.subf %93, %96 : vector<16x16xf32>
    %98 = math.exp %97 : vector<16x16xf32>
    %cst_45 = arith.constant dense<0.000000e+00> : vector<16xf32>
    %99 = vector.multi_reduction <add>, %98, %cst_45 [1] : vector<16x16xf32> to vector<16xf32>
    %100 = vector.shape_cast %99 : vector<16xf32> to vector<16x1xf32>
    %101 = tpu.reciprocal %100 {approx = true} : vector<16x1xf32> -> vector<16x1xf32>
    %102 = vector.broadcast %101 : vector<16x1xf32> to vector<16x16xf32>
    %103 = arith.mulf %98, %102 : vector<16x16xf32>
    %cst_46 = arith.constant dense<0.000000e+00> : vector<16x16xf32>
    %104 = tpu.matmul %103, %84, %cst_46 {dimension_numbers = #tpu.dot_dimension_numbers<[1], [0], [0], [1], [0, 0, 1, 1], [], []>} : vector<16x16xf32>, vector<16x16xf32>, vector<16x16xf32> -> vector<16x16xf32>
    %105 = vector.extract_strided_slice %78 {offsets = [0, 16], sizes = [16, 16], strides = [1, 1]} : vector<16x32xf32> to vector<16x16xf32>
    %106 = vector.extract_strided_slice %79 {offsets = [0, 16], sizes = [16, 16], strides = [1, 1]} : vector<16x32xf32> to vector<16x16xf32>
    %107 = vector.extract_strided_slice %80 {offsets = [0, 16], sizes = [16, 16], strides = [1, 1]} : vector<16x32xf32> to vector<16x16xf32>
    %cst_47 = arith.constant dense<0.000000e+00> : vector<16x16xf32>
    %108 = tpu.matmul %105, %106, %cst_47 {dimension_numbers = #tpu.dot_dimension_numbers<[1], [1], [0], [0], [0, 0, 1, 0], [], []>} : vector<16x16xf32>, vector<16x16xf32>, vector<16x16xf32> -> vector<16x16xf32>
    %cst_48 = arith.constant 2.500000e-01 : f32
    %109 = vector.broadcast %cst_48 : f32 to vector<16x16xf32>
    %110 = arith.mulf %108, %109 : vector<16x16xf32>
    %cst_49 = arith.constant 0.000000e+00 : f32
    %111 = vector.broadcast %cst_49 : f32 to vector<1x16xf32>
    %112 = arith.cmpf ogt, %81, %111 : vector<1x16xf32>
    %cst_50 = arith.constant -1.000000e+30 : f32
    %113 = vector.shape_cast %112 : vector<1x16xi1> to vector<1x16xi1>
    %114 = vector.broadcast %113 : vector<1x16xi1> to vector<16x16xi1>
    %115 = vector.broadcast %cst_50 : f32 to vector<16x16xf32>
    %116 = arith.select %114, %115, %110 : vector<16x16xi1>, vector<16x16xf32>
    %cst_51 = arith.constant dense<0xFF800000> : vector<16xf32>
    %117 = vector.multi_reduction <maximumf>, %116, %cst_51 [1] : vector<16x16xf32> to vector<16xf32>
    %118 = vector.shape_cast %117 : vector<16xf32> to vector<16x1xf32>
    %119 = vector.broadcast %118 : vector<16x1xf32> to vector<16x16xf32>
    %120 = arith.subf %116, %119 : vector<16x16xf32>
    %121 = math.exp %120 : vector<16x16xf32>
    %cst_52 = arith.constant dense<0.000000e+00> : vector<16xf32>
    %122 = vector.multi_reduction <add>, %121, %cst_52 [1] : vector<16x16xf32> to vector<16xf32>
    %123 = vector.shape_cast %122 : vector<16xf32> to vector<16x1xf32>
    %124 = tpu.reciprocal %123 {approx = true} : vector<16x1xf32> -> vector<16x1xf32>
    %125 = vector.broadcast %124 : vector<16x1xf32> to vector<16x16xf32>
    %126 = arith.mulf %121, %125 : vector<16x16xf32>
    %cst_53 = arith.constant dense<0.000000e+00> : vector<16x16xf32>
    %127 = tpu.matmul %126, %107, %cst_53 {dimension_numbers = #tpu.dot_dimension_numbers<[1], [0], [0], [1], [0, 0, 1, 1], [], []>} : vector<16x16xf32>, vector<16x16xf32>, vector<16x16xf32> -> vector<16x16xf32>
    %128 = tpu.concatenate %104, %127 in 1 : vector<16x16xf32>, vector<16x16xf32> -> vector<16x32xf32>
    %129 = tpu.concatenate %77, %128 in 0 : vector<16x32xf32>, vector<16x32xf32> -> vector<32x32xf32>
    %c0_54 = arith.constant 0 : index
    %c0_55 = arith.constant 0 : index
    %c0_56 = arith.constant 0 : index
    %130 = vector.load %arg10[%c0_54, %c0_55, %c0_56] : memref<1x32x32xf32, #tpu.memory_space<vmem>>, vector<1x32x32xf32>
    %131 = vector.shape_cast %130 : vector<1x32x32xf32> to vector<32x32xf32>
    %cst_57 = arith.constant dense<0.000000e+00> : vector<32x32xf32>
    %132 = tpu.matmul %129, %131, %cst_57 {dimension_numbers = #tpu.dot_dimension_numbers<[1], [0], [0], [1], [0, 0, 1, 1], [], []>} : vector<32x32xf32>, vector<32x32xf32>, vector<32x32xf32> -> vector<32x32xf32>
    %c0_58 = arith.constant 0 : index
    %c0_59 = arith.constant 0 : index
    %c0_60 = arith.constant 0 : index
    %133 = vector.load %arg11[%c0_58, %c0_59, %c0_60] : memref<1x1x32xf32, #tpu.memory_space<vmem>>, vector<1x1x32xf32>
    %134 = vector.shape_cast %133 : vector<1x1x32xf32> to vector<1x32xf32>
    %135 = vector.broadcast %134 : vector<1x32xf32> to vector<32x32xf32>
    %136 = arith.addf %132, %135 : vector<32x32xf32>
    %137 = arith.addf %136, %3 : vector<32x32xf32>
    %c0_61 = arith.constant 0 : index
    %c0_62 = arith.constant 0 : index
    %c0_63 = arith.constant 0 : index
    %138 = vector.load %arg12[%c0_61, %c0_62, %c0_63] : memref<1x1x32xf32, #tpu.memory_space<vmem>>, vector<1x1x32xf32>
    %139 = vector.shape_cast %138 : vector<1x1x32xf32> to vector<1x32xf32>
    %c0_64 = arith.constant 0 : index
    %c0_65 = arith.constant 0 : index
    %c0_66 = arith.constant 0 : index
    %140 = vector.load %arg13[%c0_64, %c0_65, %c0_66] : memref<1x1x32xf32, #tpu.memory_space<vmem>>, vector<1x1x32xf32>
    %141 = vector.shape_cast %140 : vector<1x1x32xf32> to vector<1x32xf32>
    %cst_67 = arith.constant dense<0.000000e+00> : vector<32xf32>
    %142 = vector.multi_reduction <add>, %137, %cst_67 [1] : vector<32x32xf32> to vector<32xf32>
    %143 = vector.shape_cast %142 : vector<32xf32> to vector<32x1xf32>
    %cst_68 = arith.constant 3.200000e+01 : f32
    %144 = vector.broadcast %cst_68 : f32 to vector<32x1xf32>
    %145 = arith.divf %143, %144 : vector<32x1xf32>
    %146 = vector.broadcast %145 : vector<32x1xf32> to vector<32x32xf32>
    %147 = arith.subf %137, %146 : vector<32x32xf32>
    %148 = arith.mulf %147, %147 : vector<32x32xf32>
    %cst_69 = arith.constant dense<0.000000e+00> : vector<32xf32>
    %149 = vector.multi_reduction <add>, %148, %cst_69 [1] : vector<32x32xf32> to vector<32xf32>
    %150 = vector.shape_cast %149 : vector<32xf32> to vector<32x1xf32>
    %cst_70 = arith.constant 3.200000e+01 : f32
    %151 = vector.broadcast %cst_70 : f32 to vector<32x1xf32>
    %152 = arith.divf %150, %151 : vector<32x1xf32>
    %153 = vector.broadcast %145 : vector<32x1xf32> to vector<32x32xf32>
    %154 = arith.subf %137, %153 : vector<32x32xf32>
    %cst_71 = arith.constant 9.99999974E-6 : f32
    %155 = vector.broadcast %cst_71 : f32 to vector<32x1xf32>
    %156 = arith.addf %152, %155 : vector<32x1xf32>
    %157 = math.rsqrt %156 : vector<32x1xf32>
    %158 = vector.broadcast %157 : vector<32x1xf32> to vector<32x32xf32>
    %159 = arith.mulf %154, %158 : vector<32x32xf32>
    %160 = vector.broadcast %139 : vector<1x32xf32> to vector<32x32xf32>
    %161 = arith.mulf %159, %160 : vector<32x32xf32>
    %162 = vector.broadcast %141 : vector<1x32xf32> to vector<32x32xf32>
    %163 = arith.addf %161, %162 : vector<32x32xf32>
    %164 = vector.broadcast %4 : vector<32x1xf32> to vector<32x32xf32>
    %165 = arith.mulf %163, %164 : vector<32x32xf32>
    %c0_72 = arith.constant 0 : index
    %c0_73 = arith.constant 0 : index
    %c0_74 = arith.constant 0 : index
    %166 = vector.load %arg14[%c0_72, %c0_73, %c0_74] : memref<1x32x64xf32, #tpu.memory_space<vmem>>, vector<1x32x64xf32>
    %167 = vector.shape_cast %166 : vector<1x32x64xf32> to vector<32x64xf32>
    %cst_75 = arith.constant dense<0.000000e+00> : vector<32x64xf32>
    %168 = tpu.matmul %165, %167, %cst_75 {dimension_numbers = #tpu.dot_dimension_numbers<[1], [0], [0], [1], [0, 0, 1, 1], [], []>} : vector<32x32xf32>, vector<32x64xf32>, vector<32x64xf32> -> vector<32x64xf32>
    %c0_76 = arith.constant 0 : index
    %c0_77 = arith.constant 0 : index
    %c0_78 = arith.constant 0 : index
    %169 = vector.load %arg15[%c0_76, %c0_77, %c0_78] : memref<1x1x64xf32, #tpu.memory_space<vmem>>, vector<1x1x64xf32>
    %170 = vector.shape_cast %169 : vector<1x1x64xf32> to vector<1x64xf32>
    %171 = vector.broadcast %170 : vector<1x64xf32> to vector<32x64xf32>
    %172 = arith.addf %168, %171 : vector<32x64xf32>
    %cst_79 = arith.constant 0.000000e+00 : f32
    %173 = vector.broadcast %cst_79 : f32 to vector<32x64xf32>
    %174 = arith.maximumf %172, %173 : vector<32x64xf32>
    %c0_80 = arith.constant 0 : index
    %c0_81 = arith.constant 0 : index
    %c0_82 = arith.constant 0 : index
    %175 = vector.load %arg16[%c0_80, %c0_81, %c0_82] : memref<1x64x32xf32, #tpu.memory_space<vmem>>, vector<1x64x32xf32>
    %176 = vector.shape_cast %175 : vector<1x64x32xf32> to vector<64x32xf32>
    %cst_83 = arith.constant dense<0.000000e+00> : vector<32x32xf32>
    %177 = tpu.matmul %174, %176, %cst_83 {dimension_numbers = #tpu.dot_dimension_numbers<[1], [0], [0], [1], [0, 0, 1, 1], [], []>} : vector<32x64xf32>, vector<64x32xf32>, vector<32x32xf32> -> vector<32x32xf32>
    %c0_84 = arith.constant 0 : index
    %c0_85 = arith.constant 0 : index
    %c0_86 = arith.constant 0 : index
    %178 = vector.load %arg17[%c0_84, %c0_85, %c0_86] : memref<1x1x32xf32, #tpu.memory_space<vmem>>, vector<1x1x32xf32>
    %179 = vector.shape_cast %178 : vector<1x1x32xf32> to vector<1x32xf32>
    %180 = vector.broadcast %179 : vector<1x32xf32> to vector<32x32xf32>
    %181 = arith.addf %177, %180 : vector<32x32xf32>
    %182 = arith.addf %181, %165 : vector<32x32xf32>
    %c0_87 = arith.constant 0 : index
    %c0_88 = arith.constant 0 : index
    %c0_89 = arith.constant 0 : index
    %183 = vector.load %arg18[%c0_87, %c0_88, %c0_89] : memref<1x1x32xf32, #tpu.memory_space<vmem>>, vector<1x1x32xf32>
    %184 = vector.shape_cast %183 : vector<1x1x32xf32> to vector<1x32xf32>
    %c0_90 = arith.constant 0 : index
    %c0_91 = arith.constant 0 : index
    %c0_92 = arith.constant 0 : index
    %185 = vector.load %arg19[%c0_90, %c0_91, %c0_92] : memref<1x1x32xf32, #tpu.memory_space<vmem>>, vector<1x1x32xf32>
    %186 = vector.shape_cast %185 : vector<1x1x32xf32> to vector<1x32xf32>
    %cst_93 = arith.constant dense<0.000000e+00> : vector<32xf32>
    %187 = vector.multi_reduction <add>, %182, %cst_93 [1] : vector<32x32xf32> to vector<32xf32>
    %188 = vector.shape_cast %187 : vector<32xf32> to vector<32x1xf32>
    %cst_94 = arith.constant 3.200000e+01 : f32
    %189 = vector.broadcast %cst_94 : f32 to vector<32x1xf32>
    %190 = arith.divf %188, %189 : vector<32x1xf32>
    %191 = vector.broadcast %190 : vector<32x1xf32> to vector<32x32xf32>
    %192 = arith.subf %182, %191 : vector<32x32xf32>
    %193 = arith.mulf %192, %192 : vector<32x32xf32>
    %cst_95 = arith.constant dense<0.000000e+00> : vector<32xf32>
    %194 = vector.multi_reduction <add>, %193, %cst_95 [1] : vector<32x32xf32> to vector<32xf32>
    %195 = vector.shape_cast %194 : vector<32xf32> to vector<32x1xf32>
    %cst_96 = arith.constant 3.200000e+01 : f32
    %196 = vector.broadcast %cst_96 : f32 to vector<32x1xf32>
    %197 = arith.divf %195, %196 : vector<32x1xf32>
    %198 = vector.broadcast %190 : vector<32x1xf32> to vector<32x32xf32>
    %199 = arith.subf %182, %198 : vector<32x32xf32>
    %cst_97 = arith.constant 9.99999974E-6 : f32
    %200 = vector.broadcast %cst_97 : f32 to vector<32x1xf32>
    %201 = arith.addf %197, %200 : vector<32x1xf32>
    %202 = math.rsqrt %201 : vector<32x1xf32>
    %203 = vector.broadcast %202 : vector<32x1xf32> to vector<32x32xf32>
    %204 = arith.mulf %199, %203 : vector<32x32xf32>
    %205 = vector.broadcast %184 : vector<1x32xf32> to vector<32x32xf32>
    %206 = arith.mulf %204, %205 : vector<32x32xf32>
    %207 = vector.broadcast %186 : vector<1x32xf32> to vector<32x32xf32>
    %208 = arith.addf %206, %207 : vector<32x32xf32>
    %209 = vector.broadcast %4 : vector<32x1xf32> to vector<32x32xf32>
    %210 = arith.mulf %208, %209 : vector<32x32xf32>
    %c0_98 = arith.constant 0 : index
    %c0_99 = arith.constant 0 : index
    %211 = vector.load %arg20[%c0_98, %c0_99] : memref<32x32xf32, #tpu.memory_space<vmem>>, vector<32x32xf32>
    tpu.vector_store %arg20[%c0_98, %c0_99], %210 {strides = array<i32>} : memref<32x32xf32, #tpu.memory_space<vmem>>, vector<32x32xf32>,
    return
  }
  func.func @transform_0(%arg0: i32) -> (i32, i32) {
    %c0_i32 = arith.constant 0 : i32
    %c0_i32_0 = arith.constant 0 : i32
    %c0_i32_1 = arith.constant 0 : i32
    return %c0_i32, %c0_i32_0 : i32, i32
  }
  func.func @transform_1(%arg0: i32) -> (i32, i32) {
    %c0_i32 = arith.constant 0 : i32
    %c0_i32_0 = arith.constant 0 : i32
    %c0_i32_1 = arith.constant 0 : i32
    return %c0_i32, %c0_i32_0 : i32, i32
  }
  func.func @transform_2(%arg0: i32) -> (i32, i32) {
    %c0_i32 = arith.constant 0 : i32
    %c0_i32_0 = arith.constant 0 : i32
    %c0_i32_1 = arith.constant 0 : i32
    return %c0_i32, %c0_i32_0 : i32, i32
  }
  func.func @transform_3(%arg0: i32) -> (i32, i32, i32) {
    %c0_i32 = arith.constant 0 : i32
    %c0_i32_0 = arith.constant 0 : i32
    %c0_i32_1 = arith.constant 0 : i32
    return %arg0, %c0_i32, %c0_i32_0 : i32, i32, i32
  }
  func.func @transform_4(%arg0: i32) -> (i32, i32, i32) {
    %c0_i32 = arith.constant 0 : i32
    %c0_i32_0 = arith.constant 0 : i32
    %c0_i32_1 = arith.constant 0 : i32
    return %arg0, %c0_i32, %c0_i32_0 : i32, i32, i32
  }
  func.func @transform_5(%arg0: i32) -> (i32, i32, i32) {
    %c0_i32 = arith.constant 0 : i32
    %c0_i32_0 = arith.constant 0 : i32
    %c0_i32_1 = arith.constant 0 : i32
    return %arg0, %c0_i32, %c0_i32_0 : i32, i32, i32
  }
  func.func @transform_6(%arg0: i32) -> (i32, i32, i32) {
    %c0_i32 = arith.constant 0 : i32
    %c0_i32_0 = arith.constant 0 : i32
    %c0_i32_1 = arith.constant 0 : i32
    return %arg0, %c0_i32, %c0_i32_0 : i32, i32, i32
  }
  func.func @transform_7(%arg0: i32) -> (i32, i32, i32) {
    %c0_i32 = arith.constant 0 : i32
    %c0_i32_0 = arith.constant 0 : i32
    %c0_i32_1 = arith.constant 0 : i32
    return %arg0, %c0_i32, %c0_i32_0 : i32, i32, i32
  }
  func.func @transform_8(%arg0: i32) -> (i32, i32, i32) {
    %c0_i32 = arith.constant 0 : i32
    %c0_i32_0 = arith.constant 0 : i32
    %c0_i32_1 = arith.constant 0 : i32
    return %arg0, %c0_i32, %c0_i32_0 : i32, i32, i32
  }
  func.func @transform_9(%arg0: i32) -> (i32, i32, i32) {
    %c0_i32 = arith.constant 0 : i32
    %c0_i32_0 = arith.constant 0 : i32
    %c0_i32_1 = arith.constant 0 : i32
    return %arg0, %c0_i32, %c0_i32_0 : i32, i32, i32
  }
  func.func @transform_10(%arg0: i32) -> (i32, i32, i32) {
    %c0_i32 = arith.constant 0 : i32
    %c0_i32_0 = arith.constant 0 : i32
    %c0_i32_1 = arith.constant 0 : i32
    return %arg0, %c0_i32, %c0_i32_0 : i32, i32, i32
  }
  func.func @transform_11(%arg0: i32) -> (i32, i32, i32) {
    %c0_i32 = arith.constant 0 : i32
    %c0_i32_0 = arith.constant 0 : i32
    %c0_i32_1 = arith.constant 0 : i32
    return %arg0, %c0_i32, %c0_i32_0 : i32, i32, i32
  }
  func.func @transform_12(%arg0: i32) -> (i32, i32, i32) {
    %c0_i32 = arith.constant 0 : i32
    %c0_i32_0 = arith.constant 0 : i32
    %c0_i32_1 = arith.constant 0 : i32
    return %arg0, %c0_i32, %c0_i32_0 : i32, i32, i32
  }
  func.func @transform_13(%arg0: i32) -> (i32, i32, i32) {
    %c0_i32 = arith.constant 0 : i32
    %c0_i32_0 = arith.constant 0 : i32
    %c0_i32_1 = arith.constant 0 : i32
    return %arg0, %c0_i32, %c0_i32_0 : i32, i32, i32
  }
  func.func @transform_14(%arg0: i32) -> (i32, i32, i32) {
    %c0_i32 = arith.constant 0 : i32
    %c0_i32_0 = arith.constant 0 : i32
    %c0_i32_1 = arith.constant 0 : i32
    return %arg0, %c0_i32, %c0_i32_0 : i32, i32, i32
  }
  func.func @transform_15(%arg0: i32) -> (i32, i32, i32) {
    %c0_i32 = arith.constant 0 : i32
    %c0_i32_0 = arith.constant 0 : i32
    %c0_i32_1 = arith.constant 0 : i32
    return %arg0, %c0_i32, %c0_i32_0 : i32, i32, i32
  }
  func.func @transform_16(%arg0: i32) -> (i32, i32, i32) {
    %c0_i32 = arith.constant 0 : i32
    %c0_i32_0 = arith.constant 0 : i32
    %c0_i32_1 = arith.constant 0 : i32
    return %arg0, %c0_i32, %c0_i32_0 : i32, i32, i32
  }
  func.func @transform_17(%arg0: i32) -> (i32, i32, i32) {
    %c0_i32 = arith.constant 0 : i32
    %c0_i32_0 = arith.constant 0 : i32
    %c0_i32_1 = arith.constant 0 : i32
    return %arg0, %c0_i32, %c0_i32_0 : i32, i32, i32
  }
  func.func @transform_18(%arg0: i32) -> (i32, i32, i32) {
    %c0_i32 = arith.constant 0 : i32
    %c0_i32_0 = arith.constant 0 : i32
    %c0_i32_1 = arith.constant 0 : i32
    return %arg0, %c0_i32, %c0_i32_0 : i32, i32, i32
  }
  func.func @transform_19(%arg0: i32) -> (i32, i32) {
    %c0_i32 = arith.constant 0 : i32
    %c0_i32_0 = arith.constant 0 : i32
    %c0_i32_1 = arith.constant 0 : i32
    return %c0_i32, %c0_i32_0 : i32, i32
  }
}

</mosaic_0001>

<llo_original>
// kernel: encoder_forward.1
$region0: #{encoder_forward.1}
  #allocation0 [shape = 'u32[]', space=smem, size = 0x4, offset = 0x4, fixed_abs, tag = 'smem constant byte address 0x4 - core index']
  #allocation1 [shape = 'u32[144,128]{1,0:T(1,128)}', space=vmem, size = 0x12000, scoped, tag = 'internal scratch']
  %s0 = inlined_call_operand.vmem [shape: f32[32,32], index: 0, kind: input, shape index: {}]
  %s1 = inlined_call_operand.vmem [shape: f32[2,16], index: 1, kind: input, shape index: {}]
  %s2 = inlined_call_operand.vmem [shape: f32[32,1], index: 2, kind: input, shape index: {}]
  %s3 = inlined_call_operand.vmem [shape: f32[2,32,32], index: 3, kind: input, shape index: {}]
  %s4 = inlined_call_operand.vmem [shape: f32[2,1,32], index: 4, kind: input, shape index: {}]
  %s5 = inlined_call_operand.vmem [shape: f32[2,32,32], index: 5, kind: input, shape index: {}]
  %s6 = inlined_call_operand.vmem [shape: f32[2,1,32], index: 6, kind: input, shape index: {}]
  %s7 = inlined_call_operand.vmem [shape: f32[2,32,32], index: 7, kind: input, shape index: {}]
  %s8 = inlined_call_operand.vmem [shape: f32[2,1,32], index: 8, kind: input, shape index: {}]
  %s9 = inlined_call_operand.vmem [shape: f32[2,32,32], index: 9, kind: input, shape index: {}]
  %s10 = inlined_call_operand.vmem [shape: f32[2,1,32], index: 10, kind: input, shape index: {}]
  %s11 = inlined_call_operand.vmem [shape: f32[2,1,32], index: 11, kind: input, shape index: {}]
  %s12 = inlined_call_operand.vmem [shape: f32[2,1,32], index: 12, kind: input, shape index: {}]
  %s13 = inlined_call_operand.vmem [shape: f32[2,32,64], index: 13, kind: input, shape index: {}]
  %s14 = inlined_call_operand.vmem [shape: f32[2,1,64], index: 14, kind: input, shape index: {}]
  %s15 = inlined_call_operand.vmem [shape: f32[2,64,32], index: 15, kind: input, shape index: {}]
  %s16 = inlined_call_operand.vmem [shape: f32[2,1,32], index: 16, kind: input, shape index: {}]
  %s17 = inlined_call_operand.vmem [shape: f32[2,1,32], index: 17, kind: input, shape index: {}]
  %s18 = inlined_call_operand.vmem [shape: f32[2,1,32], index: 18, kind: input, shape index: {}]
  %s19 = inlined_call_operand.hbm [shape: f32[32,32], index: 19, kind: output, shape index: {}]
  %s20 = sld [smem:[#allocation0]]
  $region113: #{encoder_forward.1} parent=0
    _
  %s22 = ssub.s32 1, %s20
  %s23 = scalar_select 0, %s22, %s20
  $region1: #{encoder_forward.1} parent=0
    #allocation2 [shape = 'u8[16384]{0}', space=vmem, size = 0x4000, scoped, tag = 'output window, operand 0, single buffered']
    #allocation3 [shape = 's32[2]{0}', space=sflag, size = 0x8, scoped, tag = 'scoped memory for encoder_forward.1']
    %24 = vsyncpa [#allocation3], 0
    loop: start=0, step=1, limit=4
    $region2: #{encoder_forward.1} parent=1 // loop_pre_header
      _
    $region3: #{encoder_forward.1} parent=1 // loop_header
      %s26 = sphi 0, %s30
      %p27 = scmp.ge.s32.totalorder %s26, 4
      %s34 = sphi 0, %s34
      %s36 = sphi 0, %s34
      %s37 = sphi 0, %s36
      %s51 = sphi 0, %s37
      %s55 = sphi 0, %s55
      %s57 = sphi 0, %s55
      %s58 = sphi 0, %s57
      %s72 = sphi 0, %s58
      %s76 = sphi 0, %s76
      %s78 = sphi 0, %s76
      %s79 = sphi 0, %s78
      %s93 = sphi 0, %s79
      %s99 = sphi 0, %s101
      %s102 = sphi 0, %s99
      %s103 = sphi 0, %s102
      %s119 = sphi 0, %s103
      %s125 = sphi 0, %s127
      %s128 = sphi 0, %s125
      %s129 = sphi 0, %s128
      %s145 = sphi 0, %s129
      %s151 = sphi 0, %s153
      %s154 = sphi 0, %s151
      %s155 = sphi 0, %s154
      %s171 = sphi 0, %s155
      %s177 = sphi 0, %s179
      %s180 = sphi 0, %s177
      %s181 = sphi 0, %s180
      %s197 = sphi 0, %s181
      %s203 = sphi 0, %s205
      %s206 = sphi 0, %s203
      %s207 = sphi 0, %s206
      %s223 = sphi 0, %s207
      %s229 = sphi 0, %s231
      %s232 = sphi 0, %s229
      %s233 = sphi 0, %s232
      %s249 = sphi 0, %s233
      %s255 = sphi 0, %s257
      %s258 = sphi 0, %s255
      %s259 = sphi 0, %s258
      %s275 = sphi 0, %s259
      %s281 = sphi 0, %s283
      %s284 = sphi 0, %s281
      %s285 = sphi 0, %s284
      %s301 = sphi 0, %s285
      %s307 = sphi 0, %s309
      %s310 = sphi 0, %s307
      %s311 = sphi 0, %s310
      %s327 = sphi 0, %s311
      %s333 = sphi 0, %s335
      %s336 = sphi 0, %s333
      %s337 = sphi 0, %s336
      %s353 = sphi 0, %s337
      %s359 = sphi 0, %s361
      %s362 = sphi 0, %s359
      %s363 = sphi 0, %s362
      %s379 = sphi 0, %s363
      %s385 = sphi 0, %s387
      %s388 = sphi 0, %s385
      %s389 = sphi 0, %s388
      %s405 = sphi 0, %s389
      %s411 = sphi 0, %s413
      %s414 = sphi 0, %s411
      %s415 = sphi 0, %s414
      %s431 = sphi 0, %s415
      %s437 = sphi 0, %s439
      %s440 = sphi 0, %s437
      %s441 = sphi 0, %s440
      %s457 = sphi 0, %s441
      %s463 = sphi 0, %s465
      %s466 = sphi 0, %s463
      %s467 = sphi 0, %s466
      %s483 = sphi 0, %s467
      %s489 = sphi 0, %s491
      %s492 = sphi 0, %s489
      %s493 = sphi 0, %s492
      %s509 = sphi 0, %s493
      %s513 = sphi 0, %s513
      %s515 = sphi 0, %s513
      %s516 = sphi 0, %s515
      %s530 = sphi 0, %s516
    $region4: #{encoder_forward.1} parent=1 // loop_header_branch
      %29 = sbr.rel (%p27) target = $region8
    $region5: #{encoder_forward.1} parent=1 // loop_body
      %s31 = ssub.s32 %s26, 1
      %s32 = ssub.s32 %s26, 2
      %s33 = sadd.s32 %s26, 1
      %s35 = sadd.s32 %s34, 1
      %p38 = scmp.eq.s32.totalorder %s26, 1
      %p39 = scmp.ne.s32.totalorder %s34, %s36
      %p40 = scmp.eq.s32.totalorder %s26, 0
      %p41 = por %p39, %p40
      %p42 = scmp.ne.s32.totalorder %s34, %s36
      %p43 = scmp.eq.s32.totalorder %s31, 1
      %p44 = por %p42, %p43
      %p45 = scmp.ne.s32.totalorder %s36, %s37
      %p46 = scmp.eq.s32.totalorder %s31, 0
      %p47 = por %p45, %p46
      %p48 = scmp.ne.s32.totalorder %s36, %s37
      %p49 = scmp.eq.s32.totalorder %s32, 1
      %p50 = por %p48, %p49
      %p52 = scmp.ne.s32.totalorder %s37, %s51
      %p53 = scmp.eq.s32.totalorder %s32, 0
      %p54 = por %p52, %p53
      %s56 = sadd.s32 %s55, 1
      %p59 = scmp.eq.s32.totalorder %s26, 1
      %p60 = scmp.ne.s32.totalorder %s55, %s57
      %p61 = scmp.eq.s32.totalorder %s26, 0
      %p62 = por %p60, %p61
      %p63 = scmp.ne.s32.totalorder %s55, %s57
      %p64 = scmp.eq.s32.totalorder %s31, 1
      %p65 = por %p63, %p64
      %p66 = scmp.ne.s32.totalorder %s57, %s58
      %p67 = scmp.eq.s32.totalorder %s31, 0
      %p68 = por %p66, %p67
      %p69 = scmp.ne.s32.totalorder %s57, %s58
      %p70 = scmp.eq.s32.totalorder %s32, 1
      %p71 = por %p69, %p70
      %p73 = scmp.ne.s32.totalorder %s58, %s72
      %p74 = scmp.eq.s32.totalorder %s32, 0
      %p75 = por %p73, %p74
      %s77 = sadd.s32 %s76, 1
      %p80 = scmp.eq.s32.totalorder %s26, 1
      %p81 = scmp.ne.s32.totalorder %s76, %s78
      %p82 = scmp.eq.s32.totalorder %s26, 0
      %p83 = por %p81, %p82
      %p84 = scmp.ne.s32.totalorder %s76, %s78
      %p85 = scmp.eq.s32.totalorder %s31, 1
      %p86 = por %p84, %p85
      %p87 = scmp.ne.s32.totalorder %s78, %s79
      %p88 = scmp.eq.s32.totalorder %s31, 0
      %p89 = por %p87, %p88
      %p90 = scmp.ne.s32.totalorder %s78, %s79
      %p91 = scmp.eq.s32.totalorder %s32, 1
      %p92 = por %p90, %p91
      %p94 = scmp.ne.s32.totalorder %s79, %s93
      %p95 = scmp.eq.s32.totalorder %s32, 0
      %p96 = por %p94, %p95
      %s97 = ssub.s32 %s26, %s33
      %p98 = scmp.eq.s32.totalorder %s97, 0
      %s100 = sadd.s32 %s99, 1
      %s101 = scalar_select %p98, %s99, %s100
      %p104 = pneg %p98
      %p105 = scmp.eq.s32.totalorder %s26, 1
      %p106 = por %p104, %p105
      %p107 = scmp.ne.s32.totalorder %s99, %s102
      %p108 = scmp.eq.s32.totalorder %s26, 0
      %p109 = por %p107, %p108
      %p110 = scmp.ne.s32.totalorder %s99, %s102
      %p111 = scmp.eq.s32.totalorder %s31, 1
      %p112 = por %p110, %p111
      %p113 = scmp.ne.s32.totalorder %s102, %s103
      %p114 = scmp.eq.s32.totalorder %s31, 0
      %p115 = por %p113, %p114
      %p116 = scmp.ne.s32.totalorder %s102, %s103
      %p117 = scmp.eq.s32.totalorder %s32, 1
      %p118 = por %p116, %p117
      %p120 = scmp.ne.s32.totalorder %s103, %s119
      %p121 = scmp.eq.s32.totalorder %s32, 0
      %p122 = por %p120, %p121
      %s123 = ssub.s32 %s26, %s33
      %p124 = scmp.eq.s32.totalorder %s123, 0
      %s126 = sadd.s32 %s125, 1
      %s127 = scalar_select %p124, %s125, %s126
      %p130 = pneg %p124
      %p131 = scmp.eq.s32.totalorder %s26, 1
      %p132 = por %p130, %p131
      %p133 = scmp.ne.s32.totalorder %s125, %s128
      %p134 = scmp.eq.s32.totalorder %s26, 0
      %p135 = por %p133, %p134
      %p136 = scmp.ne.s32.totalorder %s125, %s128
      %p137 = scmp.eq.s32.totalorder %s31, 1
      %p138 = por %p136, %p137
      %p139 = scmp.ne.s32.totalorder %s128, %s129
      %p140 = scmp.eq.s32.totalorder %s31, 0
      %p141 = por %p139, %p140
      %p142 = scmp.ne.s32.totalorder %s128, %s129
      %p143 = scmp.eq.s32.totalorder %s32, 1
      %p144 = por %p142, %p143
      %p146 = scmp.ne.s32.totalorder %s129, %s145
      %p147 = scmp.eq.s32.totalorder %s32, 0
      %p148 = por %p146, %p147
      %s149 = ssub.s32 %s26, %s33
      %p150 = scmp.eq.s32.totalorder %s149, 0
      %s152 = sadd.s32 %s151, 1
      %s153 = scalar_select %p150, %s151, %s152
      %p156 = pneg %p150
      %p157 = scmp.eq.s32.totalorder %s26, 1
      %p158 = por %p156, %p157
      %p159 = scmp.ne.s32.totalorder %s151, %s154
      %p160 = scmp.eq.s32.totalorder %s26, 0
      %p161 = por %p159, %p160
      %p162 = scmp.ne.s32.totalorder %s151, %s154
      %p163 = scmp.eq.s32.totalorder %s31, 1
      %p164 = por %p162, %p163
      %p165 = scmp.ne.s32.totalorder %s154, %s155
      %p166 = scmp.eq.s32.totalorder %s31, 0
      %p167 = por %p165, %p166
      %p168 = scmp.ne.s32.totalorder %s154, %s155
      %p169 = scmp.eq.s32.totalorder %s32, 1
      %p170 = por %p168, %p169
      %p172 = scmp.ne.s32.totalorder %s155, %s171
      %p173 = scmp.eq.s32.totalorder %s32, 0
      %p174 = por %p172, %p173
      %s175 = ssub.s32 %s26, %s33
      %p176 = scmp.eq.s32.totalorder %s175, 0
      %s178 = sadd.s32 %s177, 1
      %s179 = scalar_select %p176, %s177, %s178
      %p182 = pneg %p176
      %p183 = scmp.eq.s32.totalorder %s26, 1
      %p184 = por %p182, %p183
      %p185 = scmp.ne.s32.totalorder %s177, %s180
      %p186 = scmp.eq.s32.totalorder %s26, 0
      %p187 = por %p185, %p186
      %p188 = scmp.ne.s32.totalorder %s177, %s180
      %p189 = scmp.eq.s32.totalorder %s31, 1
      %p190 = por %p188, %p189
      %p191 = scmp.ne.s32.totalorder %s180, %s181
      %p192 = scmp.eq.s32.totalorder %s31, 0
      %p193 = por %p191, %p192
      %p194 = scmp.ne.s32.totalorder %s180, %s181
      %p195 = scmp.eq.s32.totalorder %s32, 1
      %p196 = por %p194, %p195
      %p198 = scmp.ne.s32.totalorder %s181, %s197
      %p199 = scmp.eq.s32.totalorder %s32, 0
      %p200 = por %p198, %p199
      %s201 = ssub.s32 %s26, %s33
      %p202 = scmp.eq.s32.totalorder %s201, 0
      %s204 = sadd.s32 %s203, 1
      %s205 = scalar_select %p202, %s203, %s204
      %p208 = pneg %p202
      %p209 = scmp.eq.s32.totalorder %s26, 1
      %p210 = por %p208, %p209
      %p211 = scmp.ne.s32.totalorder %s203, %s206
      %p212 = scmp.eq.s32.totalorder %s26, 0
      %p213 = por %p211, %p212
      %p214 = scmp.ne.s32.totalorder %s203, %s206
      %p215 = scmp.eq.s32.totalorder %s31, 1
      %p216 = por %p214, %p215
      %p217 = scmp.ne.s32.totalorder %s206, %s207
      %p218 = scmp.eq.s32.totalorder %s31, 0
      %p219 = por %p217, %p218
      %p220 = scmp.ne.s32.totalorder %s206, %s207
      %p221 = scmp.eq.s32.totalorder %s32, 1
      %p222 = por %p220, %p221
      %p224 = scmp.ne.s32.totalorder %s207, %s223
      %p225 = scmp.eq.s32.totalorder %s32, 0
      %p226 = por %p224, %p225
      %s227 = ssub.s32 %s26, %s33
      %p228 = scmp.eq.s32.totalorder %s227, 0
      %s230 = sadd.s32 %s229, 1
      %s231 = scalar_select %p228, %s229, %s230
      %p234 = pneg %p228
      %p235 = scmp.eq.s32.totalorder %s26, 1
      %p236 = por %p234, %p235
      %p237 = scmp.ne.s32.totalorder %s229, %s232
      %p238 = scmp.eq.s32.totalorder %s26, 0
      %p239 = por %p237, %p238
      %p240 = scmp.ne.s32.totalorder %s229, %s232
      %p241 = scmp.eq.s32.totalorder %s31, 1
      %p242 = por %p240, %p241
      %p243 = scmp.ne.s32.totalorder %s232, %s233
      %p244 = scmp.eq.s32.totalorder %s31, 0
      %p245 = por %p243, %p244
      %p246 = scmp.ne.s32.totalorder %s232, %s233
      %p247 = scmp.eq.s32.totalorder %s32, 1
      %p248 = por %p246, %p247
      %p250 = scmp.ne.s32.totalorder %s233, %s249
      %p251 = scmp.eq.s32.totalorder %s32, 0
      %p252 = por %p250, %p251
      %s253 = ssub.s32 %s26, %s33
      %p254 = scmp.eq.s32.totalorder %s253, 0
      %s256 = sadd.s32 %s255, 1
      %s257 = scalar_select %p254, %s255, %s256
      %p260 = pneg %p254
      %p261 = scmp.eq.s32.totalorder %s26, 1
      %p262 = por %p260, %p261
      %p263 = scmp.ne.s32.totalorder %s255, %s258
      %p264 = scmp.eq.s32.totalorder %s26, 0
      %p265 = por %p263, %p264
      %p266 = scmp.ne.s32.totalorder %s255, %s258
      %p267 = scmp.eq.s32.totalorder %s31, 1
      %p268 = por %p266, %p267
      %p269 = scmp.ne.s32.totalorder %s258, %s259
      %p270 = scmp.eq.s32.totalorder %s31, 0
      %p271 = por %p269, %p270
      %p272 = scmp.ne.s32.totalorder %s258, %s259
      %p273 = scmp.eq.s32.totalorder %s32, 1
      %p274 = por %p272, %p273
      %p276 = scmp.ne.s32.totalorder %s259, %s275
      %p277 = scmp.eq.s32.totalorder %s32, 0
      %p278 = por %p276, %p277
      %s279 = ssub.s32 %s26, %s33
      %p280 = scmp.eq.s32.totalorder %s279, 0
      %s282 = sadd.s32 %s281, 1
      %s283 = scalar_select %p280, %s281, %s282
      %p286 = pneg %p280
      %p287 = scmp.eq.s32.totalorder %s26, 1
      %p288 = por %p286, %p287
      %p289 = scmp.ne.s32.totalorder %s281, %s284
      %p290 = scmp.eq.s32.totalorder %s26, 0
      %p291 = por %p289, %p290
      %p292 = scmp.ne.s32.totalorder %s281, %s284
      %p293 = scmp.eq.s32.totalorder %s31, 1
      %p294 = por %p292, %p293
      %p295 = scmp.ne.s32.totalorder %s284, %s285
      %p296 = scmp.eq.s32.totalorder %s31, 0
      %p297 = por %p295, %p296
      %p298 = scmp.ne.s32.totalorder %s284, %s285
      %p299 = scmp.eq.s32.totalorder %s32, 1
      %p300 = por %p298, %p299
      %p302 = scmp.ne.s32.totalorder %s285, %s301
      %p303 = scmp.eq.s32.totalorder %s32, 0
      %p304 = por %p302, %p303
      %s305 = ssub.s32 %s26, %s33
      %p306 = scmp.eq.s32.totalorder %s305, 0
      %s308 = sadd.s32 %s307, 1
      %s309 = scalar_select %p306, %s307, %s308
      %p312 = pneg %p306
      %p313 = scmp.eq.s32.totalorder %s26, 1
      %p314 = por %p312, %p313
      %p315 = scmp.ne.s32.totalorder %s307, %s310
      %p316 = scmp.eq.s32.totalorder %s26, 0
      %p317 = por %p315, %p316
      %p318 = scmp.ne.s32.totalorder %s307, %s310
      %p319 = scmp.eq.s32.totalorder %s31, 1
      %p320 = por %p318, %p319
      %p321 = scmp.ne.s32.totalorder %s310, %s311
      %p322 = scmp.eq.s32.totalorder %s31, 0
      %p323 = por %p321, %p322
      %p324 = scmp.ne.s32.totalorder %s310, %s311
      %p325 = scmp.eq.s32.totalorder %s32, 1
      %p326 = por %p324, %p325
      %p328 = scmp.ne.s32.totalorder %s311, %s327
      %p329 = scmp.eq.s32.totalorder %s32, 0
      %p330 = por %p328, %p329
      %s331 = ssub.s32 %s26, %s33
      %p332 = scmp.eq.s32.totalorder %s331, 0
      %s334 = sadd.s32 %s333, 1
      %s335 = scalar_select %p332, %s333, %s334
      %p338 = pneg %p332
      %p339 = scmp.eq.s32.totalorder %s26, 1
      %p340 = por %p338, %p339
      %p341 = scmp.ne.s32.totalorder %s333, %s336
      %p342 = scmp.eq.s32.totalorder %s26, 0
      %p343 = por %p341, %p342
      %p344 = scmp.ne.s32.totalorder %s333, %s336
      %p345 = scmp.eq.s32.totalorder %s31, 1
      %p346 = por %p344, %p345
      %p347 = scmp.ne.s32.totalorder %s336, %s337
      %p348 = scmp.eq.s32.totalorder %s31, 0
      %p349 = por %p347, %p348
      %p350 = scmp.ne.s32.totalorder %s336, %s337
      %p351 = scmp.eq.s32.totalorder %s32, 1
      %p352 = por %p350, %p351
      %p354 = scmp.ne.s32.totalorder %s337, %s353
      %p355 = scmp.eq.s32.totalorder %s32, 0
      %p356 = por %p354, %p355
      %s357 = ssub.s32 %s26, %s33
      %p358 = scmp.eq.s32.totalorder %s357, 0
      %s360 = sadd.s32 %s359, 1
      %s361 = scalar_select %p358, %s359, %s360
      %p364 = pneg %p358
      %p365 = scmp.eq.s32.totalorder %s26, 1
      %p366 = por %p364, %p365
      %p367 = scmp.ne.s32.totalorder %s359, %s362
      %p368 = scmp.eq.s32.totalorder %s26, 0
      %p369 = por %p367, %p368
      %p370 = scmp.ne.s32.totalorder %s359, %s362
      %p371 = scmp.eq.s32.totalorder %s31, 1
      %p372 = por %p370, %p371
      %p373 = scmp.ne.s32.totalorder %s362, %s363
      %p374 = scmp.eq.s32.totalorder %s31, 0
      %p375 = por %p373, %p374
      %p376 = scmp.ne.s32.totalorder %s362, %s363
      %p377 = scmp.eq.s32.totalorder %s32, 1
      %p378 = por %p376, %p377
      %p380 = scmp.ne.s32.totalorder %s363, %s379
      %p381 = scmp.eq.s32.totalorder %s32, 0
      %p382 = por %p380, %p381
      %s383 = ssub.s32 %s26, %s33
      %p384 = scmp.eq.s32.totalorder %s383, 0
      %s386 = sadd.s32 %s385, 1
      %s387 = scalar_select %p384, %s385, %s386
      %p390 = pneg %p384
      %p391 = scmp.eq.s32.totalorder %s26, 1
      %p392 = por %p390, %p391
      %p393 = scmp.ne.s32.totalorder %s385, %s388
      %p394 = scmp.eq.s32.totalorder %s26, 0
      %p395 = por %p393, %p394
      %p396 = scmp.ne.s32.totalorder %s385, %s388
      %p397 = scmp.eq.s32.totalorder %s31, 1
      %p398 = por %p396, %p397
      %p399 = scmp.ne.s32.totalorder %s388, %s389
      %p400 = scmp.eq.s32.totalorder %s31, 0
      %p401 = por %p399, %p400
      %p402 = scmp.ne.s32.totalorder %s388, %s389
      %p403 = scmp.eq.s32.totalorder %s32, 1
      %p404 = por %p402, %p403
      %p406 = scmp.ne.s32.totalorder %s389, %s405
      %p407 = scmp.eq.s32.totalorder %s32, 0
      %p408 = por %p406, %p407
      %s409 = ssub.s32 %s26, %s33
      %p410 = scmp.eq.s32.totalorder %s409, 0
      %s412 = sadd.s32 %s411, 1
      %s413 = scalar_select %p410, %s411, %s412
      %p416 = pneg %p410
      %p417 = scmp.eq.s32.totalorder %s26, 1
      %p418 = por %p416, %p417
      %p419 = scmp.ne.s32.totalorder %s411, %s414
      %p420 = scmp.eq.s32.totalorder %s26, 0
      %p421 = por %p419, %p420
      %p422 = scmp.ne.s32.totalorder %s411, %s414
      %p423 = scmp.eq.s32.totalorder %s31, 1
      %p424 = por %p422, %p423
      %p425 = scmp.ne.s32.totalorder %s414, %s415
      %p426 = scmp.eq.s32.totalorder %s31, 0
      %p427 = por %p425, %p426
      %p428 = scmp.ne.s32.totalorder %s414, %s415
      %p429 = scmp.eq.s32.totalorder %s32, 1
      %p430 = por %p428, %p429
      %p432 = scmp.ne.s32.totalorder %s415, %s431
      %p433 = scmp.eq.s32.totalorder %s32, 0
      %p434 = por %p432, %p433
      %s435 = ssub.s32 %s26, %s33
      %p436 = scmp.eq.s32.totalorder %s435, 0
      %s438 = sadd.s32 %s437, 1
      %s439 = scalar_select %p436, %s437, %s438
      %p442 = pneg %p436
      %p443 = scmp.eq.s32.totalorder %s26, 1
      %p444 = por %p442, %p443
      %p445 = scmp.ne.s32.totalorder %s437, %s440
      %p446 = scmp.eq.s32.totalorder %s26, 0
      %p447 = por %p445, %p446
      %p448 = scmp.ne.s32.totalorder %s437, %s440
      %p449 = scmp.eq.s32.totalorder %s31, 1
      %p450 = por %p448, %p449
      %p451 = scmp.ne.s32.totalorder %s440, %s441
      %p452 = scmp.eq.s32.totalorder %s31, 0
      %p453 = por %p451, %p452
      %p454 = scmp.ne.s32.totalorder %s440, %s441
      %p455 = scmp.eq.s32.totalorder %s32, 1
      %p456 = por %p454, %p455
      %p458 = scmp.ne.s32.totalorder %s441, %s457
      %p459 = scmp.eq.s32.totalorder %s32, 0
      %p460 = por %p458, %p459
      %s461 = ssub.s32 %s26, %s33
      %p462 = scmp.eq.s32.totalorder %s461, 0
      %s464 = sadd.s32 %s463, 1
      %s465 = scalar_select %p462, %s463, %s464
      %p468 = pneg %p462
      %p469 = scmp.eq.s32.totalorder %s26, 1
      %p470 = por %p468, %p469
      %p471 = scmp.ne.s32.totalorder %s463, %s466
      %p472 = scmp.eq.s32.totalorder %s26, 0
      %p473 = por %p471, %p472
      %p474 = scmp.ne.s32.totalorder %s463, %s466
      %p475 = scmp.eq.s32.totalorder %s31, 1
      %p476 = por %p474, %p475
      %p477 = scmp.ne.s32.totalorder %s466, %s467
      %p478 = scmp.eq.s32.totalorder %s31, 0
      %p479 = por %p477, %p478
      %p480 = scmp.ne.s32.totalorder %s466, %s467
      %p481 = scmp.eq.s32.totalorder %s32, 1
      %p482 = por %p480, %p481
      %p484 = scmp.ne.s32.totalorder %s467, %s483
      %p485 = scmp.eq.s32.totalorder %s32, 0
      %p486 = por %p484, %p485
      %s487 = ssub.s32 %s26, %s33
      %p488 = scmp.eq.s32.totalorder %s487, 0
      %s490 = sadd.s32 %s489, 1
      %s491 = scalar_select %p488, %s489, %s490
      %p494 = pneg %p488
      %p495 = scmp.eq.s32.totalorder %s26, 1
      %p496 = por %p494, %p495
      %p497 = scmp.ne.s32.totalorder %s489, %s492
      %p498 = scmp.eq.s32.totalorder %s26, 0
      %p499 = por %p497, %p498
      %p500 = scmp.ne.s32.totalorder %s489, %s492
      %p501 = scmp.eq.s32.totalorder %s31, 1
      %p502 = por %p500, %p501
      %p503 = scmp.ne.s32.totalorder %s492, %s493
      %p504 = scmp.eq.s32.totalorder %s31, 0
      %p505 = por %p503, %p504
      %p506 = scmp.ne.s32.totalorder %s492, %s493
      %p507 = scmp.eq.s32.totalorder %s32, 1
      %p508 = por %p506, %p507
      %p510 = scmp.ne.s32.totalorder %s493, %s509
      %p511 = scmp.eq.s32.totalorder %s32, 0
      %p512 = por %p510, %p511
      %s514 = sadd.s32 %s513, 1
      %p517 = scmp.eq.s32.totalorder %s26, 1
      %p518 = scmp.ne.s32.totalorder %s513, %s515
      %p519 = scmp.eq.s32.totalorder %s26, 0
      %p520 = por %p518, %p519
      %p521 = scmp.ne.s32.totalorder %s513, %s515
      %p522 = scmp.eq.s32.totalorder %s31, 1
      %p523 = por %p521, %p522
      %p524 = scmp.ne.s32.totalorder %s515, %s516
      %p525 = scmp.eq.s32.totalorder %s31, 0
      %p526 = por %p524, %p525
      %p527 = scmp.ne.s32.totalorder %s515, %s516
      %p528 = scmp.eq.s32.totalorder %s32, 1
      %p529 = por %p527, %p528
      %p531 = scmp.ne.s32.totalorder %s516, %s530
      %p532 = scmp.eq.s32.totalorder %s32, 0
      %p533 = por %p531, %p532
      %p534 = scmp.le.s32.totalorder 1, %s26
      %p535 = scmp.lt.s32.totalorder %s26, 3
      %p536 = pnand %p534, %p535
      %p537 = pneg %p536
      // Predicated region
      $region9: #{encoder_forward.1} parent=5 // pred_check
        _
      $region10: #{encoder_forward.1} parent=5 // pred_check_branch
        %539 = sbr.rel (%p536) target = $region12
      $region11: #{encoder_forward.1} parent=5 // pred_region
        %s540 = ssub.s32 %s26, 1
        // Predicated region
        $region13: #{encoder_forward.1} parent=11 // pred_check
          %p541 = pneg %p47
        $region14: #{encoder_forward.1} parent=11 // pred_check_branch
          %543 = sbr.rel (%p541) target = $region16
        $region15: #{encoder_forward.1} parent=11 // pred_region
          _
        $region16: #{encoder_forward.1} parent=11 // pred_fallthru
          _
        // Predicated region
        $region17: #{encoder_forward.1} parent=11 // pred_check
          %p544 = pneg %p68
        $region18: #{encoder_forward.1} parent=11 // pred_check_branch
          %546 = sbr.rel (%p544) target = $region20
        $region19: #{encoder_forward.1} parent=11 // pred_region
          _
        $region20: #{encoder_forward.1} parent=11 // pred_fallthru
          _
        // Predicated region
        $region21: #{encoder_forward.1} parent=11 // pred_check
          %p547 = pneg %p89
        $region22: #{encoder_forward.1} parent=11 // pred_check_branch
          %549 = sbr.rel (%p547) target = $region24
        $region23: #{encoder_forward.1} parent=11 // pred_region
          _
        $region24: #{encoder_forward.1} parent=11 // pred_fallthru
          _
      $region12: #{encoder_forward.1} parent=5 // pred_fallthru
        _
      %p550 = scmp.lt.s32.totalorder %s26, 2
      // Predicated region
      $region25: #{encoder_forward.1} parent=5 // pred_check
        %p551 = pneg %p550
      $region26: #{encoder_forward.1} parent=5 // pred_check_branch
        %553 = sbr.rel (%p551) target = $region28
      $region27: #{encoder_forward.1} parent=5 // pred_region
        // Predicated region
        $region29: #{encoder_forward.1} parent=27 // pred_check
          %p554 = pneg %p109
        $region30: #{encoder_forward.1} parent=27 // pred_check_branch
          %556 = sbr.rel (%p554) target = $region32
        $region31: #{encoder_forward.1} parent=27 // pred_region
          %p557 = scmp.lt.s32.totalorder %s26, 1
          %s558 = scalar_select %p557, %s26, 1
          %s559 = smul.addr %s558, 4
          %s560 = smul.addr %s559, 8
          %s561 = scalar_lea.vmem %s3, %s560
        $region32: #{encoder_forward.1} parent=27 // pred_fallthru
          _
        // Predicated region
        $region33: #{encoder_forward.1} parent=27 // pred_check
          %p562 = pneg %p135
        $region34: #{encoder_forward.1} parent=27 // pred_check_branch
          %564 = sbr.rel (%p562) target = $region36
        $region35: #{encoder_forward.1} parent=27 // pred_region
          %p565 = scmp.lt.s32.totalorder %s26, 1
          %s566 = scalar_select %p565, %s26, 1
          %s567 = scalar_lea.vmem %s4, %s566
        $region36: #{encoder_forward.1} parent=27 // pred_fallthru
          _
        // Predicated region
        $region37: #{encoder_forward.1} parent=27 // pred_check
          %p568 = pneg %p161
        $region38: #{encoder_forward.1} parent=27 // pred_check_branch
          %570 = sbr.rel (%p568) target = $region40
        $region39: #{encoder_forward.1} parent=27 // pred_region
          %p571 = scmp.lt.s32.totalorder %s26, 1
          %s572 = scalar_select %p571, %s26, 1
          %s573 = smul.addr %s572, 4
          %s574 = smul.addr %s573, 8
          %s575 = scalar_lea.vmem %s5, %s574
        $region40: #{encoder_forward.1} parent=27 // pred_fallthru
          _
        // Predicated region
        $region41: #{encoder_forward.1} parent=27 // pred_check
          %p576 = pneg %p187
        $region42: #{encoder_forward.1} parent=27 // pred_check_branch
          %578 = sbr.rel (%p576) target = $region44
        $region43: #{encoder_forward.1} parent=27 // pred_region
          %p579 = scmp.lt.s32.totalorder %s26, 1
          %s580 = scalar_select %p579, %s26, 1
          %s581 = scalar_lea.vmem %s6, %s580
        $region44: #{encoder_forward.1} parent=27 // pred_fallthru
          _
        // Predicated region
        $region45: #{encoder_forward.1} parent=27 // pred_check
          %p582 = pneg %p213
        $region46: #{encoder_forward.1} parent=27 // pred_check_branch
          %584 = sbr.rel (%p582) target = $region48
        $region47: #{encoder_forward.1} parent=27 // pred_region
          %p585 = scmp.lt.s32.totalorder %s26, 1
          %s586 = scalar_select %p585, %s26, 1
          %s587 = smul.addr %s586, 4
          %s588 = smul.addr %s587, 8
          %s589 = scalar_lea.vmem %s7, %s588
        $region48: #{encoder_forward.1} parent=27 // pred_fallthru
          _
        // Predicated region
        $region49: #{encoder_forward.1} parent=27 // pred_check
          %p590 = pneg %p239
        $region50: #{encoder_forward.1} parent=27 // pred_check_branch
          %592 = sbr.rel (%p590) target = $region52
        $region51: #{encoder_forward.1} parent=27 // pred_region
          %p593 = scmp.lt.s32.totalorder %s26, 1
          %s594 = scalar_select %p593, %s26, 1
          %s595 = scalar_lea.vmem %s8, %s594
        $region52: #{encoder_forward.1} parent=27 // pred_fallthru
          _
        // Predicated region
        $region53: #{encoder_forward.1} parent=27 // pred_check
          %p596 = pneg %p265
        $region54: #{encoder_forward.1} parent=27 // pred_check_branch
          %598 = sbr.rel (%p596) target = $region56
        $region55: #{encoder_forward.1} parent=27 // pred_region
          %p599 = scmp.lt.s32.totalorder %s26, 1
          %s600 = scalar_select %p599, %s26, 1
          %s601 = smul.addr %s600, 4
          %s602 = smul.addr %s601, 8
          %s603 = scalar_lea.vmem %s9, %s602
        $region56: #{encoder_forward.1} parent=27 // pred_fallthru
          _
        // Predicated region
        $region57: #{encoder_forward.1} parent=27 // pred_check
          %p604 = pneg %p291
        $region58: #{encoder_forward.1} parent=27 // pred_check_branch
          %606 = sbr.rel (%p604) target = $region60
        $region59: #{encoder_forward.1} parent=27 // pred_region
          %p607 = scmp.lt.s32.totalorder %s26, 1
          %s608 = scalar_select %p607, %s26, 1
          %s609 = scalar_lea.vmem %s10, %s608
        $region60: #{encoder_forward.1} parent=27 // pred_fallthru
          _
        // Predicated region
        $region61: #{encoder_forward.1} parent=27 // pred_check
          %p610 = pneg %p317
        $region62: #{encoder_forward.1} parent=27 // pred_check_branch
          %612 = sbr.rel (%p610) target = $region64
        $region63: #{encoder_forward.1} parent=27 // pred_region
          %p613 = scmp.lt.s32.totalorder %s26, 1
          %s614 = scalar_select %p613, %s26, 1
          %s615 = scalar_lea.vmem %s11, %s614
        $region64: #{encoder_forward.1} parent=27 // pred_fallthru
          _
        // Predicated region
        $region65: #{encoder_forward.1} parent=27 // pred_check
          %p616 = pneg %p343
        $region66: #{encoder_forward.1} parent=27 // pred_check_branch
          %618 = sbr.rel (%p616) target = $region68
        $region67: #{encoder_forward.1} parent=27 // pred_region
          %p619 = scmp.lt.s32.totalorder %s26, 1
          %s620 = scalar_select %p619, %s26, 1
          %s621 = scalar_lea.vmem %s12, %s620
        $region68: #{encoder_forward.1} parent=27 // pred_fallthru
          _
        // Predicated region
        $region69: #{encoder_forward.1} parent=27 // pred_check
          %p622 = pneg %p369
        $region70: #{encoder_forward.1} parent=27 // pred_check_branch
          %624 = sbr.rel (%p622) target = $region72
        $region71: #{encoder_forward.1} parent=27 // pred_region
          %p625 = scmp.lt.s32.totalorder %s26, 1
          %s626 = scalar_select %p625, %s26, 1
          %s627 = smul.addr %s626, 4
          %s628 = smul.addr %s627, 8
          %s629 = scalar_lea.vmem %s13, %s628
        $region72: #{encoder_forward.1} parent=27 // pred_fallthru
          _
        // Predicated region
        $region73: #{encoder_forward.1} parent=27 // pred_check
          %p630 = pneg %p395
        $region74: #{encoder_forward.1} parent=27 // pred_check_branch
          %632 = sbr.rel (%p630) target = $region76
        $region75: #{encoder_forward.1} parent=27 // pred_region
          %p633 = scmp.lt.s32.totalorder %s26, 1
          %s634 = scalar_select %p633, %s26, 1
          %s635 = scalar_lea.vmem %s14, %s634
        $region76: #{encoder_forward.1} parent=27 // pred_fallthru
          _
        // Predicated region
        $region77: #{encoder_forward.1} parent=27 // pred_check
          %p636 = pneg %p421
        $region78: #{encoder_forward.1} parent=27 // pred_check_branch
          %638 = sbr.rel (%p636) target = $region80
        $region79: #{encoder_forward.1} parent=27 // pred_region
          %p639 = scmp.lt.s32.totalorder %s26, 1
          %s640 = scalar_select %p639, %s26, 1
          %s641 = smul.addr %s640, 8
          %s642 = smul.addr %s641, 8
          %s643 = scalar_lea.vmem %s15, %s642
        $region80: #{encoder_forward.1} parent=27 // pred_fallthru
          _
        // Predicated region
        $region81: #{encoder_forward.1} parent=27 // pred_check
          %p644 = pneg %p447
        $region82: #{encoder_forward.1} parent=27 // pred_check_branch
          %646 = sbr.rel (%p644) target = $region84
        $region83: #{encoder_forward.1} parent=27 // pred_region
          %p647 = scmp.lt.s32.totalorder %s26, 1
          %s648 = scalar_select %p647, %s26, 1
          %s649 = scalar_lea.vmem %s16, %s648
        $region84: #{encoder_forward.1} parent=27 // pred_fallthru
          _
        // Predicated region
        $region85: #{encoder_forward.1} parent=27 // pred_check
          %p650 = pneg %p473
        $region86: #{encoder_forward.1} parent=27 // pred_check_branch
          %652 = sbr.rel (%p650) target = $region88
        $region87: #{encoder_forward.1} parent=27 // pred_region
          %p653 = scmp.lt.s32.totalorder %s26, 1
          %s654 = scalar_select %p653, %s26, 1
          %s655 = scalar_lea.vmem %s17, %s654
        $region88: #{encoder_forward.1} parent=27 // pred_fallthru
          _
        // Predicated region
        $region89: #{encoder_forward.1} parent=27 // pred_check
          %p656 = pneg %p499
        $region90: #{encoder_forward.1} parent=27 // pred_check_branch
          %658 = sbr.rel (%p656) target = $region92
        $region91: #{encoder_forward.1} parent=27 // pred_region
          %p659 = scmp.lt.s32.totalorder %s26, 1
          %s660 = scalar_select %p659, %s26, 1
          %s661 = scalar_lea.vmem %s18, %s660
        $region92: #{encoder_forward.1} parent=27 // pred_fallthru
          _
      $region28: #{encoder_forward.1} parent=5 // pred_fallthru
        _
      %p662 = scmp.le.s32.totalorder 1, %s26
      %p663 = scmp.lt.s32.totalorder %s26, 3
      %p664 = pnand %p662, %p663
      %p665 = pneg %p664
      // Predicated region
      $region93: #{encoder_forward.1} parent=5 // pred_check
        _
      $region94: #{encoder_forward.1} parent=5 // pred_check_branch
        %667 = sbr.rel (%p664) target = $region96
      $region95: #{encoder_forward.1} parent=5 // pred_region
        %s668 = ssub.s32 %s26, 1
        %p669 = pneg %p47
        %p670 = pneg %p44
        %p671 = pneg %p68
        %p672 = pneg %p65
        %p673 = pneg %p89
        %p674 = pneg %p86
        %p675 = scmp.lt.s32.totalorder %s31, 1
        %s676 = scalar_select %p675, %s31, 1
        %s677 = smul.addr %s676, 4
        %s678 = smul.addr %s677, 8
        %s679 = scalar_lea.vmem %s3, %s678
        %p680 = pneg %p115
        %p681 = pneg %p112
        %p682 = scmp.lt.s32.totalorder %s31, 1
        %s683 = scalar_select %p682, %s31, 1
        %s684 = scalar_lea.vmem %s4, %s683
        %p685 = pneg %p141
        %p686 = pneg %p138
        %p687 = scmp.lt.s32.totalorder %s31, 1
        %s688 = scalar_select %p687, %s31, 1
        %s689 = smul.addr %s688, 4
        %s690 = smul.addr %s689, 8
        %s691 = scalar_lea.vmem %s5, %s690
        %p692 = pneg %p167
        %p693 = pneg %p164
        %p694 = scmp.lt.s32.totalorder %s31, 1
        %s695 = scalar_select %p694, %s31, 1
        %s696 = scalar_lea.vmem %s6, %s695
        %p697 = pneg %p193
        %p698 = pneg %p190
        %p699 = scmp.lt.s32.totalorder %s31, 1
        %s700 = scalar_select %p699, %s31, 1
        %s701 = smul.addr %s700, 4
        %s702 = smul.addr %s701, 8
        %s703 = scalar_lea.vmem %s7, %s702
        %p704 = pneg %p219
        %p705 = pneg %p216
        %p706 = scmp.lt.s32.totalorder %s31, 1
        %s707 = scalar_select %p706, %s31, 1
        %s708 = scalar_lea.vmem %s8, %s707
        %p709 = pneg %p245
        %p710 = pneg %p242
        %p711 = scmp.lt.s32.totalorder %s31, 1
        %s712 = scalar_select %p711, %s31, 1
        %s713 = smul.addr %s712, 4
        %s714 = smul.addr %s713, 8
        %s715 = scalar_lea.vmem %s9, %s714
        %p716 = pneg %p271
        %p717 = pneg %p268
        %p718 = scmp.lt.s32.totalorder %s31, 1
        %s719 = scalar_select %p718, %s31, 1
        %s720 = scalar_lea.vmem %s10, %s719
        %p721 = pneg %p297
        %p722 = pneg %p294
        %p723 = scmp.lt.s32.totalorder %s31, 1
        %s724 = scalar_select %p723, %s31, 1
        %s725 = scalar_lea.vmem %s11, %s724
        %p726 = pneg %p323
        %p727 = pneg %p320
        %p728 = scmp.lt.s32.totalorder %s31, 1
        %s729 = scalar_select %p728, %s31, 1
        %s730 = scalar_lea.vmem %s12, %s729
        %p731 = pneg %p349
        %p732 = pneg %p346
        %p733 = scmp.lt.s32.totalorder %s31, 1
        %s734 = scalar_select %p733, %s31, 1
        %s735 = smul.addr %s734, 4
        %s736 = smul.addr %s735, 8
        %s737 = scalar_lea.vmem %s13, %s736
        %p738 = pneg %p375
        %p739 = pneg %p372
        %p740 = scmp.lt.s32.totalorder %s31, 1
        %s741 = scalar_select %p740, %s31, 1
        %s742 = scalar_lea.vmem %s14, %s741
        %p743 = pneg %p401
        %p744 = pneg %p398
        %p745 = scmp.lt.s32.totalorder %s31, 1
        %s746 = scalar_select %p745, %s31, 1
        %s747 = smul.addr %s746, 8
        %s748 = smul.addr %s747, 8
        %s749 = scalar_lea.vmem %s15, %s748
        %p750 = pneg %p427
        %p751 = pneg %p424
        %p752 = scmp.lt.s32.totalorder %s31, 1
        %s753 = scalar_select %p752, %s31, 1
        %s754 = scalar_lea.vmem %s16, %s753
        %p755 = pneg %p453
        %p756 = pneg %p450
        %p757 = scmp.lt.s32.totalorder %s31, 1
        %s758 = scalar_select %p757, %s31, 1
        %s759 = scalar_lea.vmem %s17, %s758
        %p760 = pneg %p479
        %p761 = pneg %p476
        %p762 = scmp.lt.s32.totalorder %s31, 1
        %s763 = scalar_select %p762, %s31, 1
        %s764 = scalar_lea.vmem %s18, %s763
        %p765 = pneg %p505
        %p766 = pneg %p502
        %p767 = pneg %p526
        %p768 = pneg %p523
        %p769 = scmp.lt.s32.totalorder %s31, 1
        %s770 = scalar_select %p769, %s31, 1
        %s771 = smul.addr %s770, 4
        %s772 = smul.addr %s771, 8
        %s773 = scalar_lea.vmem %s3, %s772
        %p774 = scmp.lt.s32.totalorder %s31, 1
        %s775 = scalar_select %p774, %s31, 1
        %s776 = scalar_lea.vmem %s4, %s775
        %p777 = scmp.lt.s32.totalorder %s31, 1
        %s778 = scalar_select %p777, %s31, 1
        %s779 = smul.addr %s778, 4
        %s780 = smul.addr %s779, 8
        %s781 = scalar_lea.vmem %s5, %s780
        %p782 = scmp.lt.s32.totalorder %s31, 1
        %s783 = scalar_select %p782, %s31, 1
        %s784 = scalar_lea.vmem %s6, %s783
        %p785 = scmp.lt.s32.totalorder %s31, 1
        %s786 = scalar_select %p785, %s31, 1
        %s787 = smul.addr %s786, 4
        %s788 = smul.addr %s787, 8
        %s789 = scalar_lea.vmem %s7, %s788
        %p790 = scmp.lt.s32.totalorder %s31, 1
        %s791 = scalar_select %p790, %s31, 1
        %s792 = scalar_lea.vmem %s8, %s791
        %p793 = scmp.lt.s32.totalorder %s31, 1
        %s794 = scalar_select %p793, %s31, 1
        %s795 = smul.addr %s794, 4
        %s796 = smul.addr %s795, 8
        %s797 = scalar_lea.vmem %s9, %s796
        %p798 = scmp.lt.s32.totalorder %s31, 1
        %s799 = scalar_select %p798, %s31, 1
        %s800 = scalar_lea.vmem %s10, %s799
        %p801 = scmp.lt.s32.totalorder %s31, 1
        %s802 = scalar_select %p801, %s31, 1
        %s803 = scalar_lea.vmem %s11, %s802
        %p804 = scmp.lt.s32.totalorder %s31, 1
        %s805 = scalar_select %p804, %s31, 1
        %s806 = scalar_lea.vmem %s12, %s805
        %p807 = scmp.lt.s32.totalorder %s31, 1
        %s808 = scalar_select %p807, %s31, 1
        %s809 = smul.addr %s808, 4
        %s810 = smul.addr %s809, 8
        %s811 = scalar_lea.vmem %s13, %s810
        %p812 = scmp.lt.s32.totalorder %s31, 1
        %s813 = scalar_select %p812, %s31, 1
        %s814 = scalar_lea.vmem %s14, %s813
        %p815 = scmp.lt.s32.totalorder %s31, 1
        %s816 = scalar_select %p815, %s31, 1
        %s817 = smul.addr %s816, 8
        %s818 = smul.addr %s817, 8
        %s819 = scalar_lea.vmem %s15, %s818
        %p820 = scmp.lt.s32.totalorder %s31, 1
        %s821 = scalar_select %p820, %s31, 1
        %s822 = scalar_lea.vmem %s16, %s821
        %p823 = scmp.lt.s32.totalorder %s31, 1
        %s824 = scalar_select %p823, %s31, 1
        %s825 = scalar_lea.vmem %s17, %s824
        %p826 = scmp.lt.s32.totalorder %s31, 1
        %s827 = scalar_select %p826, %s31, 1
        %s828 = scalar_lea.vmem %s18, %s827
        %p829 = scmp.eq.s32.totalorder %s31, 0
        // Predicated region
        $region97: #{encoder_forward.1} parent=95 // pred_check
          %p830 = pneg %p829
        $region98: #{encoder_forward.1} parent=95 // pred_check_branch
          %832 = sbr.rel (%p830) target = $region100
        $region99: #{encoder_forward.1} parent=95 // pred_region
          %v833 = vld [vmem:[%s0] sm:$0xff]
          %v834 = vld [vmem:[%s0 + $0x8] sm:$0xff]
          %v835 = vld [vmem:[%s0 + $0x10] sm:$0xff]
          %v836 = vld [vmem:[%s0 + $0x18] sm:$0xff]
          %vm837 = vcmask 261120
          %838 = vst.msk [vmem:[#allocation2] sm:$0xff] %vm837, %v833
          %839 = vst.msk [vmem:[#allocation2 + $0x8] sm:$0xff] %vm837, %v834
          %840 = vst.msk [vmem:[#allocation2 + $0x10] sm:$0xff] %vm837, %v835
          %841 = vst.msk [vmem:[#allocation2 + $0x18] sm:$0xff] %vm837, %v836
        $region100: #{encoder_forward.1} parent=95 // pred_fallthru
          _
        %v842 = vld [vmem:[#allocation2] sm:$0xff]
        %v843 = vld [vmem:[#allocation2 + $0x8] sm:$0xff]
        %v844 = vld [vmem:[#allocation2 + $0x10] sm:$0xff]
        %v845 = vld [vmem:[#allocation2 + $0x18] sm:$0xff]
        %v846 = vld [vmem:[%s2] sm:$0xff]
        %v847 = vld [vmem:[%s2 + $0x8] sm:$0xff]
        %v848 = vld [vmem:[%s2 + $0x10] sm:$0xff]
        %v849 = vld [vmem:[%s2 + $0x18] sm:$0xff]
        %v850 = vld [vmem:[%s1] sm:$0x3]
        %v851 = vld [vmem:[%s773] sm:$0xff]
        %v852 = vld [vmem:[%s773 + $0x8] sm:$0xff]
        %v853 = vld [vmem:[%s773 + $0x10] sm:$0xff]
        %v854 = vld [vmem:[%s773 + $0x18] sm:$0xff]
        %v855 = vld [vmem:[%s776] sm:$0x1]
        %v857 = vlaneseq
        %v858 = vshrl.u32 %v857, 7
        %v859 = vsub.s32 0, %v858
        %v860 = vrot.slane %v855, %v859
        %vm862 = vcmask 261120
        %v864 = vsel %vm862, %v842, 0
        %v867 = vsel %vm862, %v843, 0
        %v870 = vsel %vm862, %v844, 0
        %v873 = vsel %vm862, %v845, 0
        %875 = vmatprep.subr.mxu0 0.0
        %876 = vmatpush1.msra.mxu0 %v851
        %877 = vmatprep.subr.mxu0 0.0
        %878 = vmatpush1.msra.mxu0 %v852
        %879 = vmatprep.subr.mxu0 0.0
        %880 = vmatpush1.msra.mxu0 %v853
        %881 = vmatprep.subr.mxu0 0.0
        %882 = vmatpush1.msra.mxu0 %v854
        %883 = vmatprep.subr.mxu0 0.0
        %884 = vmatpush1.msra.mxu0 0.0
        %885 = vmatprep.subr.mxu0 0.0
        %886 = vmatpush1.msra.mxu0 0.0
        %887 = vmatprep.subr.mxu0 0.0
        %888 = vmatpush1.msra.mxu0 0.0
        %889 = vmatprep.subr.mxu0 0.0
        %890 = vmatpush1.msra.mxu0 0.0
        %891 = vmatprep.subr.mxu0 0.0
        %892 = vmatpush1.msra.mxu0 0.0
        %893 = vmatprep.subr.mxu0 0.0
        %894 = vmatpush1.msra.mxu0 0.0
        %895 = vmatprep.subr.mxu0 0.0
        %896 = vmatpush1.msra.mxu0 0.0
        %897 = vmatprep.subr.mxu0 0.0
        %898 = vmatpush1.msra.mxu0 0.0
        %899 = vmatprep.subr.mxu0 0.0
        %900 = vmatpush1.msra.mxu0 0.0
        %901 = vmatprep.subr.mxu0 0.0
        %902 = vmatpush1.msra.mxu0 0.0
        %903 = vmatprep.subr.mxu0 0.0
        %904 = vmatpush1.msra.mxu0 0.0
        %905 = vmatprep.subr.mxu0 0.0
        %906 = vmatpush1.msra.mxu0 0.0
        %907 = vmatprep.subr.mxu0 0.0
        %908 = vmatpush1.msra.mxu0 0.0
        %909 = vmatprep.subr.mxu0 0.0
        %910 = vmatpush1.msra.mxu0 0.0
        %911 = vmatprep.subr.mxu0 0.0
        %912 = vmatpush1.msra.mxu0 0.0
        %913 = vmatprep.subr.mxu0 0.0
        %914 = vmatpush1.msra.mxu0 0.0
        %915 = vmatprep.subr.mxu0 0.0
        %916 = vmatpush1.msra.mxu0 0.0
        %917 = vmatprep.subr.mxu0 0.0
        %918 = vmatpush1.msra.mxu0 0.0
        %919 = vmatprep.subr.mxu0 0.0
        %920 = vmatpush1.msra.mxu0 0.0
        %921 = vmatprep.subr.mxu0 0.0
        %922 = vmatpush1.msra.mxu0 0.0
        %923 = vmatprep.subr.mxu0 0.0
        %924 = vmatpush1.msra.mxu0 0.0
        %925 = vmatprep.subr.mxu0 0.0
        %926 = vmatpush1.msra.mxu0 0.0
        %927 = vmatprep.subr.mxu0 0.0
        %928 = vmatpush1.msra.mxu0 0.0
        %929 = vmatprep.subr.mxu0 0.0
        %930 = vmatpush1.msra.mxu0 0.0
        %931 = vmatprep.subr.mxu0 0.0
        %932 = vmatpush1.msra.mxu0 0.0
        %933 = vmatprep.subr.mxu0 0.0
        %934 = vmatpush1.msra.mxu0 0.0
        %935 = vmatprep.subr.mxu0 0.0
        %936 = vmatpush1.msra.mxu0 0.0
        %937 = vmatprep.subr.mxu0 0.0
        %938 = vmatpush1.msra.mxu0 0.0
        %939 = vmatprep.mubr.f32.mxu0 0.0
        %940 = vmatmul.mubr.f32.gmra.mrb[0].mxu0 %v864
        %v941 = vpop.f32.mrb[0].mxu0
        %v942 = vadd.f32 %v860, %v941
        %v943 = vpop.f32.mrb[0].mxu0
        %944 = vmatprep.mubr.f32.mxu0 0.0
        %945 = vmatmul.mubr.f32.gmra.mrb[0].mxu0 %v867
        %v946 = vpop.f32.mrb[0].mxu0
        %v947 = vadd.f32 %v860, %v946
        %v948 = vpop.f32.mrb[0].mxu0
        %949 = vmatprep.mubr.f32.mxu0 0.0
        %950 = vmatmul.mubr.f32.gmra.mrb[0].mxu0 %v870
        %v951 = vpop.f32.mrb[0].mxu0
        %v952 = vadd.f32 %v860, %v951
        %v953 = vpop.f32.mrb[0].mxu0
        %954 = vmatprep.mubr.f32.mxu0 0.0
        %955 = vmatmul.mubr.f32.gmra.mrb[0].mxu0 %v873
        %v956 = vpop.f32.mrb[0].mxu0
        %v957 = vadd.f32 %v860, %v956
        %v958 = vpop.f32.mrb[0].mxu0
        %959 = vdwg.mxu0
        %v960 = vld [vmem:[%s781] sm:$0xff]
        %v961 = vld [vmem:[%s781 + $0x8] sm:$0xff]
        %v962 = vld [vmem:[%s781 + $0x10] sm:$0xff]
        %v963 = vld [vmem:[%s781 + $0x18] sm:$0xff]
        %v964 = vld [vmem:[%s784] sm:$0x1]
        %v966 = vlaneseq
        %v967 = vshrl.u32 %v966, 7
        %v968 = vsub.s32 0, %v967
        %v969 = vrot.slane %v964, %v968
        %971 = vmatprep.subr.mxu0 0.0
        %972 = vmatpush1.msra.mxu0 %v960
        %973 = vmatprep.subr.mxu0 0.0
        %974 = vmatpush1.msra.mxu0 %v961
        %975 = vmatprep.subr.mxu0 0.0
        %976 = vmatpush1.msra.mxu0 %v962
        %977 = vmatprep.subr.mxu0 0.0
        %978 = vmatpush1.msra.mxu0 %v963
        %979 = vmatprep.subr.mxu0 0.0
        %980 = vmatpush1.msra.mxu0 0.0
        %981 = vmatprep.subr.mxu0 0.0
        %982 = vmatpush1.msra.mxu0 0.0
        %983 = vmatprep.subr.mxu0 0.0
        %984 = vmatpush1.msra.mxu0 0.0
        %985 = vmatprep.subr.mxu0 0.0
        %986 = vmatpush1.msra.mxu0 0.0
        %987 = vmatprep.subr.mxu0 0.0
        %988 = vmatpush1.msra.mxu0 0.0
        %989 = vmatprep.subr.mxu0 0.0
        %990 = vmatpush1.msra.mxu0 0.0
        %991 = vmatprep.subr.mxu0 0.0
        %992 = vmatpush1.msra.mxu0 0.0
        %993 = vmatprep.subr.mxu0 0.0
        %994 = vmatpush1.msra.mxu0 0.0
        %995 = vmatprep.subr.mxu0 0.0
        %996 = vmatpush1.msra.mxu0 0.0
        %997 = vmatprep.subr.mxu0 0.0
        %998 = vmatpush1.msra.mxu0 0.0
        %999 = vmatprep.subr.mxu0 0.0
        %1000 = vmatpush1.msra.mxu0 0.0
        %1001 = vmatprep.subr.mxu0 0.0
        %1002 = vmatpush1.msra.mxu0 0.0
        %1003 = vmatprep.subr.mxu0 0.0
        %1004 = vmatpush1.msra.mxu0 0.0
        %1005 = vmatprep.subr.mxu0 0.0
        %1006 = vmatpush1.msra.mxu0 0.0
        %1007 = vmatprep.subr.mxu0 0.0
        %1008 = vmatpush1.msra.mxu0 0.0
        %1009 = vmatprep.subr.mxu0 0.0
        %1010 = vmatpush1.msra.mxu0 0.0
        %1011 = vmatprep.subr.mxu0 0.0
        %1012 = vmatpush1.msra.mxu0 0.0
        %1013 = vmatprep.subr.mxu0 0.0
        %1014 = vmatpush1.msra.mxu0 0.0
        %1015 = vmatprep.subr.mxu0 0.0
        %1016 = vmatpush1.msra.mxu0 0.0
        %1017 = vmatprep.subr.mxu0 0.0
        %1018 = vmatpush1.msra.mxu0 0.0
        %1019 = vmatprep.subr.mxu0 0.0
        %1020 = vmatpush1.msra.mxu0 0.0
        %1021 = vmatprep.subr.mxu0 0.0
        %1022 = vmatpush1.msra.mxu0 0.0
        %1023 = vmatprep.subr.mxu0 0.0
        %1024 = vmatpush1.msra.mxu0 0.0
        %1025 = vmatprep.subr.mxu0 0.0
        %1026 = vmatpush1.msra.mxu0 0.0
        %1027 = vmatprep.subr.mxu0 0.0
        %1028 = vmatpush1.msra.mxu0 0.0
        %1029 = vmatprep.subr.mxu0 0.0
        %1030 = vmatpush1.msra.mxu0 0.0
        %1031 = vmatprep.subr.mxu0 0.0
        %1032 = vmatpush1.msra.mxu0 0.0
        %1033 = vmatprep.subr.mxu0 0.0
        %1034 = vmatpush1.msra.mxu0 0.0
        %1035 = vmatprep.mubr.f32.mxu0 0.0
        %1036 = vmatmul.mubr.f32.gmra.mrb[0].mxu0 %v864
        %v1037 = vpop.f32.mrb[0].mxu0
        %v1038 = vadd.f32 %v969, %v1037
        %v1039 = vpop.f32.mrb[0].mxu0
        %1040 = vmatprep.mubr.f32.mxu0 0.0
        %1041 = vmatmul.mubr.f32.gmra.mrb[0].mxu0 %v867
        %v1042 = vpop.f32.mrb[0].mxu0
        %v1043 = vadd.f32 %v969, %v1042
        %v1044 = vpop.f32.mrb[0].mxu0
        %1045 = vmatprep.mubr.f32.mxu0 0.0
        %1046 = vmatmul.mubr.f32.gmra.mrb[0].mxu0 %v870
        %v1047 = vpop.f32.mrb[0].mxu0
        %v1048 = vadd.f32 %v969, %v1047
        %v1049 = vpop.f32.mrb[0].mxu0
        %1050 = vmatprep.mubr.f32.mxu0 0.0
        %1051 = vmatmul.mubr.f32.gmra.mrb[0].mxu0 %v873
        %v1052 = vpop.f32.mrb[0].mxu0
        %v1053 = vadd.f32 %v969, %v1052
        %v1054 = vpop.f32.mrb[0].mxu0
        %1055 = vdwg.mxu0
        %v1056 = vld [vmem:[%s789] sm:$0xff]
        %v1057 = vld [vmem:[%s789 + $0x8] sm:$0xff]
        %v1058 = vld [vmem:[%s789 + $0x10] sm:$0xff]
        %v1059 = vld [vmem:[%s789 + $0x18] sm:$0xff]
        %v1060 = vld [vmem:[%s792] sm:$0x1]
        %v1062 = vlaneseq
        %v1063 = vshrl.u32 %v1062, 7
        %v1064 = vsub.s32 0, %v1063
        %v1065 = vrot.slane %v1060, %v1064
        %1067 = vmatprep.subr.mxu0 0.0
        %1068 = vmatpush1.msra.mxu0 %v1056
        %1069 = vmatprep.subr.mxu0 0.0
        %1070 = vmatpush1.msra.mxu0 %v1057
        %1071 = vmatprep.subr.mxu0 0.0
        %1072 = vmatpush1.msra.mxu0 %v1058
        %1073 = vmatprep.subr.mxu0 0.0
        %1074 = vmatpush1.msra.mxu0 %v1059
        %1075 = vmatprep.subr.mxu0 0.0
        %1076 = vmatpush1.msra.mxu0 0.0
        %1077 = vmatprep.subr.mxu0 0.0
        %1078 = vmatpush1.msra.mxu0 0.0
        %1079 = vmatprep.subr.mxu0 0.0
        %1080 = vmatpush1.msra.mxu0 0.0
        %1081 = vmatprep.subr.mxu0 0.0
        %1082 = vmatpush1.msra.mxu0 0.0
        %1083 = vmatprep.subr.mxu0 0.0
        %1084 = vmatpush1.msra.mxu0 0.0
        %1085 = vmatprep.subr.mxu0 0.0
        %1086 = vmatpush1.msra.mxu0 0.0
        %1087 = vmatprep.subr.mxu0 0.0
        %1088 = vmatpush1.msra.mxu0 0.0
        %1089 = vmatprep.subr.mxu0 0.0
        %1090 = vmatpush1.msra.mxu0 0.0
        %1091 = vmatprep.subr.mxu0 0.0
        %1092 = vmatpush1.msra.mxu0 0.0
        %1093 = vmatprep.subr.mxu0 0.0
        %1094 = vmatpush1.msra.mxu0 0.0
        %1095 = vmatprep.subr.mxu0 0.0
        %1096 = vmatpush1.msra.mxu0 0.0
        %1097 = vmatprep.subr.mxu0 0.0
        %1098 = vmatpush1.msra.mxu0 0.0
        %1099 = vmatprep.subr.mxu0 0.0
        %1100 = vmatpush1.msra.mxu0 0.0
        %1101 = vmatprep.subr.mxu0 0.0
        %1102 = vmatpush1.msra.mxu0 0.0
        %1103 = vmatprep.subr.mxu0 0.0
        %1104 = vmatpush1.msra.mxu0 0.0
        %1105 = vmatprep.subr.mxu0 0.0
        %1106 = vmatpush1.msra.mxu0 0.0
        %1107 = vmatprep.subr.mxu0 0.0
        %1108 = vmatpush1.msra.mxu0 0.0
        %1109 = vmatprep.subr.mxu0 0.0
        %1110 = vmatpush1.msra.mxu0 0.0
        %1111 = vmatprep.subr.mxu0 0.0
        %1112 = vmatpush1.msra.mxu0 0.0
        %1113 = vmatprep.subr.mxu0 0.0
        %1114 = vmatpush1.msra.mxu0 0.0
        %1115 = vmatprep.subr.mxu0 0.0
        %1116 = vmatpush1.msra.mxu0 0.0
        %1117 = vmatprep.subr.mxu0 0.0
        %1118 = vmatpush1.msra.mxu0 0.0
        %1119 = vmatprep.subr.mxu0 0.0
        %1120 = vmatpush1.msra.mxu0 0.0
        %1121 = vmatprep.subr.mxu0 0.0
        %1122 = vmatpush1.msra.mxu0 0.0
        %1123 = vmatprep.subr.mxu0 0.0
        %1124 = vmatpush1.msra.mxu0 0.0
        %1125 = vmatprep.subr.mxu0 0.0
        %1126 = vmatpush1.msra.mxu0 0.0
        %1127 = vmatprep.subr.mxu0 0.0
        %1128 = vmatpush1.msra.mxu0 0.0
        %1129 = vmatprep.subr.mxu0 0.0
        %1130 = vmatpush1.msra.mxu0 0.0
        %1131 = vmatprep.mubr.f32.mxu0 0.0
        %1132 = vmatmul.mubr.f32.gmra.mrb[0].mxu0 %v864
        %v1133 = vpop.f32.mrb[0].mxu0
        %v1134 = vadd.f32 %v1065, %v1133
        %v1135 = vpop.f32.mrb[0].mxu0
        %1136 = vmatprep.mubr.f32.mxu0 0.0
        %1137 = vmatmul.mubr.f32.gmra.mrb[0].mxu0 %v867
        %v1138 = vpop.f32.mrb[0].mxu0
        %v1139 = vadd.f32 %v1065, %v1138
        %v1140 = vpop.f32.mrb[0].mxu0
        %1141 = vmatprep.mubr.f32.mxu0 0.0
        %1142 = vmatmul.mubr.f32.gmra.mrb[0].mxu0 %v870
        %v1143 = vpop.f32.mrb[0].mxu0
        %v1144 = vadd.f32 %v1065, %v1143
        %v1145 = vpop.f32.mrb[0].mxu0
        %1146 = vmatprep.mubr.f32.mxu0 0.0
        %1147 = vmatmul.mubr.f32.gmra.mrb[0].mxu0 %v873
        %v1148 = vpop.f32.mrb[0].mxu0
        %v1149 = vadd.f32 %v1065, %v1148
        %v1150 = vpop.f32.mrb[0].mxu0
        %1151 = vdwg.mxu0
        %vm1152 = vcmask 130048
        %v1154 = vsel %vm1152, %v942, 0
        %v1157 = vsel %vm1152, %v947, 0
        %v1160 = vsel %vm1152, %v1038, 0
        %v1163 = vsel %vm1152, %v1043, 0
        %1165 = vmatprep.subr.mxu0 0.0
        %1166 = vmatpush1.xpose.msra.mxu0 %v1160
        %1167 = vmatprep.subr.mxu0 0.0
        %1168 = vmatpush1.xpose.msra.mxu0 %v1163
        %1169 = vmatprep.subr.mxu0 0.0
        %1170 = vmatpush1.xpose.msra.mxu0 0.0
        %1171 = vmatprep.subr.mxu0 0.0
        %1172 = vmatpush1.xpose.msra.mxu0 0.0
        %1173 = vmatprep.subr.mxu0 0.0
        %1174 = vmatpush1.xpose.msra.mxu0 0.0
        %1175 = vmatprep.subr.mxu0 0.0
        %1176 = vmatpush1.xpose.msra.mxu0 0.0
        %1177 = vmatprep.subr.mxu0 0.0
        %1178 = vmatpush1.xpose.msra.mxu0 0.0
        %1179 = vmatprep.subr.mxu0 0.0
        %1180 = vmatpush1.xpose.msra.mxu0 0.0
        %1181 = vmatprep.subr.mxu0 0.0
        %1182 = vmatpush1.xpose.msra.mxu0 0.0
        %1183 = vmatprep.subr.mxu0 0.0
        %1184 = vmatpush1.xpose.msra.mxu0 0.0
        %1185 = vmatprep.subr.mxu0 0.0
        %1186 = vmatpush1.xpose.msra.mxu0 0.0
        %1187 = vmatprep.subr.mxu0 0.0
        %1188 = vmatpush1.xpose.msra.mxu0 0.0
        %1189 = vmatprep.subr.mxu0 0.0
        %1190 = vmatpush1.xpose.msra.mxu0 0.0
        %1191 = vmatprep.subr.mxu0 0.0
        %1192 = vmatpush1.xpose.msra.mxu0 0.0
        %1193 = vmatprep.subr.mxu0 0.0
        %1194 = vmatpush1.xpose.msra.mxu0 0.0
        %1195 = vmatprep.subr.mxu0 0.0
        %1196 = vmatpush1.xpose.msra.mxu0 0.0
        %1197 = vmatprep.subr.mxu0 0.0
        %1198 = vmatpush1.xpose.msra.mxu0 0.0
        %1199 = vmatprep.subr.mxu0 0.0
        %1200 = vmatpush1.xpose.msra.mxu0 0.0
        %1201 = vmatprep.subr.mxu0 0.0
        %1202 = vmatpush1.xpose.msra.mxu0 0.0
        %1203 = vmatprep.subr.mxu0 0.0
        %1204 = vmatpush1.xpose.msra.mxu0 0.0
        %1205 = vmatprep.subr.mxu0 0.0
        %1206 = vmatpush1.xpose.msra.mxu0 0.0
        %1207 = vmatprep.subr.mxu0 0.0
        %1208 = vmatpush1.xpose.msra.mxu0 0.0
        %1209 = vmatprep.subr.mxu0 0.0
        %1210 = vmatpush1.xpose.msra.mxu0 0.0
        %1211 = vmatprep.subr.mxu0 0.0
        %1212 = vmatpush1.xpose.msra.mxu0 0.0
        %1213 = vmatprep.subr.mxu0 0.0
        %1214 = vmatpush1.xpose.msra.mxu0 0.0
        %1215 = vmatprep.subr.mxu0 0.0
        %1216 = vmatpush1.xpose.msra.mxu0 0.0
        %1217 = vmatprep.subr.mxu0 0.0
        %1218 = vmatpush1.xpose.msra.mxu0 0.0
        %1219 = vmatprep.subr.mxu0 0.0
        %1220 = vmatpush1.xpose.msra.mxu0 0.0
        %1221 = vmatprep.subr.mxu0 0.0
        %1222 = vmatpush1.xpose.msra.mxu0 0.0
        %1223 = vmatprep.subr.mxu0 0.0
        %1224 = vmatpush1.xpose.msra.mxu0 0.0
        %1225 = vmatprep.subr.mxu0 0.0
        %1226 = vmatpush1.xpose.msra.mxu0 0.0
        %1227 = vmatprep.subr.mxu0 0.0
        %1228 = vmatpush1.xpose.msra.mxu0 0.0
        %1229 = vmatprep.mubr.f32.mxu0 0.0
        %1230 = vmatmul.mubr.f32.gmra.mrb[0].mxu0 %v1154
        %v1231 = vpop.f32.mrb[0].mxu0
        %v1232 = vadd.f32 0.0, %v1231
        %v1233 = vpop.f32.mrb[0].mxu0
        %1234 = vmatprep.mubr.f32.mxu0 0.0
        %1235 = vmatmul.mubr.f32.gmra.mrb[0].mxu0 %v1157
        %v1236 = vpop.f32.mrb[0].mxu0
        %v1237 = vadd.f32 0.0, %v1236
        %v1238 = vpop.f32.mrb[0].mxu0
        %1239 = vdwg.mxu0
        %v1240 = vmul.f32 %v1232, 0.25
        %v1241 = vmul.f32 %v1237, 0.25
        %vm1242 = vcmp.gt.f32.partialorder %v850, 0.0
        %v1243 = vsel %vm1242, 1, 0
        %v1244 = vlaneseq
        %v1245 = vshrl.u32 %v1244, 7
        %v1246 = vsub.s32 0, %v1245
        %v1247 = vrot.slane %v1243, %v1246
        %vm1248 = vcmp.eq.s32.totalorder %v1247, 1
        %v1249 = vsel %vm1248, -1e+30, %v1240
        %v1250 = vsel %vm1248, -1e+30, %v1241
        %v1251 = vsel %vm1152, %v1249, -inf
        %1252 = vmax.xlane.f32.xlu0 %v1251
        %v1253 = vpop.xlane.xlu0 %1252
        %v1254 = vsel %vm1152, %v1250, -inf
        %1255 = vmax.xlane.f32.xlu0 %v1254
        %v1256 = vpop.xlane.xlu0 %1255
        %v1257 = vsub.f32 %v1249, %v1253
        %v1258 = vsub.f32 %v1250, %v1256
        %v1259 = vmul.f32 %v1257, 1.442695
        %v1260 = vpow.pop %v1259
        %v1261 = vmul.f32 %v1258, 1.442695
        %v1262 = vpow.pop %v1261
        %v1263 = vsel %vm1152, %v1260, 0.0
        %1264 = vadd.xlane.f32.xlu0 %v1263
        %v1265 = vpop.xlane.xlu0 %1264
        %v1266 = vsel %vm1152, %v1262, 0.0
        %1267 = vadd.xlane.f32.xlu0 %v1266
        %v1268 = vpop.xlane.xlu0 %1267
        %v1269 = vrcp.pop %v1265
        %v1270 = vrcp.pop %v1268
        %v1271 = vmul.f32 %v1260, %v1269
        %v1272 = vmul.f32 %v1262, %v1270
        %v1274 = vsel %vm1152, %v1271, 0
        %v1277 = vsel %vm1152, %v1272, 0
        %1279 = vmatprep.subr.mxu0 0.0
        %1280 = vmatpush1.msra.mxu0 %v1134
        %1281 = vmatprep.subr.mxu0 0.0
        %1282 = vmatpush1.msra.mxu0 %v1139
        %1283 = vmatprep.subr.mxu0 0.0
        %1284 = vmatpush1.msra.mxu0 0.0
        %1285 = vmatprep.subr.mxu0 0.0
        %1286 = vmatpush1.msra.mxu0 0.0
        %1287 = vmatprep.subr.mxu0 0.0
        %1288 = vmatpush1.msra.mxu0 0.0
        %1289 = vmatprep.subr.mxu0 0.0
        %1290 = vmatpush1.msra.mxu0 0.0
        %1291 = vmatprep.subr.mxu0 0.0
        %1292 = vmatpush1.msra.mxu0 0.0
        %1293 = vmatprep.subr.mxu0 0.0
        %1294 = vmatpush1.msra.mxu0 0.0
        %1295 = vmatprep.subr.mxu0 0.0
        %1296 = vmatpush1.msra.mxu0 0.0
        %1297 = vmatprep.subr.mxu0 0.0
        %1298 = vmatpush1.msra.mxu0 0.0
        %1299 = vmatprep.subr.mxu0 0.0
        %1300 = vmatpush1.msra.mxu0 0.0
        %1301 = vmatprep.subr.mxu0 0.0
        %1302 = vmatpush1.msra.mxu0 0.0
        %1303 = vmatprep.subr.mxu0 0.0
        %1304 = vmatpush1.msra.mxu0 0.0
        %1305 = vmatprep.subr.mxu0 0.0
        %1306 = vmatpush1.msra.mxu0 0.0
        %1307 = vmatprep.subr.mxu0 0.0
        %1308 = vmatpush1.msra.mxu0 0.0
        %1309 = vmatprep.subr.mxu0 0.0
        %1310 = vmatpush1.msra.mxu0 0.0
        %1311 = vmatprep.subr.mxu0 0.0
        %1312 = vmatpush1.msra.mxu0 0.0
        %1313 = vmatprep.subr.mxu0 0.0
        %1314 = vmatpush1.msra.mxu0 0.0
        %1315 = vmatprep.subr.mxu0 0.0
        %1316 = vmatpush1.msra.mxu0 0.0
        %1317 = vmatprep.subr.mxu0 0.0
        %1318 = vmatpush1.msra.mxu0 0.0
        %1319 = vmatprep.subr.mxu0 0.0
        %1320 = vmatpush1.msra.mxu0 0.0
        %1321 = vmatprep.subr.mxu0 0.0
        %1322 = vmatpush1.msra.mxu0 0.0
        %1323 = vmatprep.subr.mxu0 0.0
        %1324 = vmatpush1.msra.mxu0 0.0
        %1325 = vmatprep.subr.mxu0 0.0
        %1326 = vmatpush1.msra.mxu0 0.0
        %1327 = vmatprep.subr.mxu0 0.0
        %1328 = vmatpush1.msra.mxu0 0.0
        %1329 = vmatprep.subr.mxu0 0.0
        %1330 = vmatpush1.msra.mxu0 0.0
        %1331 = vmatprep.subr.mxu0 0.0
        %1332 = vmatpush1.msra.mxu0 0.0
        %1333 = vmatprep.subr.mxu0 0.0
        %1334 = vmatpush1.msra.mxu0 0.0
        %1335 = vmatprep.subr.mxu0 0.0
        %1336 = vmatpush1.msra.mxu0 0.0
        %1337 = vmatprep.subr.mxu0 0.0
        %1338 = vmatpush1.msra.mxu0 0.0
        %1339 = vmatprep.subr.mxu0 0.0
        %1340 = vmatpush1.msra.mxu0 0.0
        %1341 = vmatprep.subr.mxu0 0.0
        %1342 = vmatpush1.msra.mxu0 0.0
        %1343 = vmatprep.mubr.f32.mxu0 0.0
        %1344 = vmatmul.mubr.f32.gmra.mrb[0].mxu0 %v1274
        %v1345 = vpop.f32.mrb[0].mxu0
        %v1346 = vadd.f32 0.0, %v1345
        %v1347 = vpop.f32.mrb[0].mxu0
        %1348 = vmatprep.mubr.f32.mxu0 0.0
        %1349 = vmatmul.mubr.f32.gmra.mrb[0].mxu0 %v1277
        %v1350 = vpop.f32.mrb[0].mxu0
        %v1351 = vadd.f32 0.0, %v1350
        %v1352 = vpop.f32.mrb[0].mxu0
        %1353 = vdwg.mxu0
        %1354 = vrot.lane.b32.xlu0 %v942, 112
        %v1355 = vpop.permute.xlu0 %1354
        %1356 = vrot.lane.b32.xlu0 %v947, 112
        %v1357 = vpop.permute.xlu0 %1356
        %1358 = vrot.lane.b32.xlu0 %v1038, 112
        %v1359 = vpop.permute.xlu0 %1358
        %1360 = vrot.lane.b32.xlu0 %v1043, 112
        %v1361 = vpop.permute.xlu0 %1360
        %v1362 = vsel %vm1152, %v1355, 0
        %v1364 = vsel %vm1152, %v1357, 0
        %v1366 = vsel %vm1152, %v1359, 0
        %v1368 = vsel %vm1152, %v1361, 0
        %1370 = vmatprep.subr.mxu0 0.0
        %1371 = vmatpush1.xpose.msra.mxu0 %v1366
        %1372 = vmatprep.subr.mxu0 0.0
        %1373 = vmatpush1.xpose.msra.mxu0 %v1368
        %1374 = vmatprep.subr.mxu0 0.0
        %1375 = vmatpush1.xpose.msra.mxu0 0.0
        %1376 = vmatprep.subr.mxu0 0.0
        %1377 = vmatpush1.xpose.msra.mxu0 0.0
        %1378 = vmatprep.subr.mxu0 0.0
        %1379 = vmatpush1.xpose.msra.mxu0 0.0
        %1380 = vmatprep.subr.mxu0 0.0
        %1381 = vmatpush1.xpose.msra.mxu0 0.0
        %1382 = vmatprep.subr.mxu0 0.0
        %1383 = vmatpush1.xpose.msra.mxu0 0.0
        %1384 = vmatprep.subr.mxu0 0.0
        %1385 = vmatpush1.xpose.msra.mxu0 0.0
        %1386 = vmatprep.subr.mxu0 0.0
        %1387 = vmatpush1.xpose.msra.mxu0 0.0
        %1388 = vmatprep.subr.mxu0 0.0
        %1389 = vmatpush1.xpose.msra.mxu0 0.0
        %1390 = vmatprep.subr.mxu0 0.0
        %1391 = vmatpush1.xpose.msra.mxu0 0.0
        %1392 = vmatprep.subr.mxu0 0.0
        %1393 = vmatpush1.xpose.msra.mxu0 0.0
        %1394 = vmatprep.subr.mxu0 0.0
        %1395 = vmatpush1.xpose.msra.mxu0 0.0
        %1396 = vmatprep.subr.mxu0 0.0
        %1397 = vmatpush1.xpose.msra.mxu0 0.0
        %1398 = vmatprep.subr.mxu0 0.0
        %1399 = vmatpush1.xpose.msra.mxu0 0.0
        %1400 = vmatprep.subr.mxu0 0.0
        %1401 = vmatpush1.xpose.msra.mxu0 0.0
        %1402 = vmatprep.subr.mxu0 0.0
        %1403 = vmatpush1.xpose.msra.mxu0 0.0
        %1404 = vmatprep.subr.mxu0 0.0
        %1405 = vmatpush1.xpose.msra.mxu0 0.0
        %1406 = vmatprep.subr.mxu0 0.0
        %1407 = vmatpush1.xpose.msra.mxu0 0.0
        %1408 = vmatprep.subr.mxu0 0.0
        %1409 = vmatpush1.xpose.msra.mxu0 0.0
        %1410 = vmatprep.subr.mxu0 0.0
        %1411 = vmatpush1.xpose.msra.mxu0 0.0
        %1412 = vmatprep.subr.mxu0 0.0
        %1413 = vmatpush1.xpose.msra.mxu0 0.0
        %1414 = vmatprep.subr.mxu0 0.0
        %1415 = vmatpush1.xpose.msra.mxu0 0.0
        %1416 = vmatprep.subr.mxu0 0.0
        %1417 = vmatpush1.xpose.msra.mxu0 0.0
        %1418 = vmatprep.subr.mxu0 0.0
        %1419 = vmatpush1.xpose.msra.mxu0 0.0
        %1420 = vmatprep.subr.mxu0 0.0
        %1421 = vmatpush1.xpose.msra.mxu0 0.0
        %1422 = vmatprep.subr.mxu0 0.0
        %1423 = vmatpush1.xpose.msra.mxu0 0.0
        %1424 = vmatprep.subr.mxu0 0.0
        %1425 = vmatpush1.xpose.msra.mxu0 0.0
        %1426 = vmatprep.subr.mxu0 0.0
        %1427 = vmatpush1.xpose.msra.mxu0 0.0
        %1428 = vmatprep.subr.mxu0 0.0
        %1429 = vmatpush1.xpose.msra.mxu0 0.0
        %1430 = vmatprep.subr.mxu0 0.0
        %1431 = vmatpush1.xpose.msra.mxu0 0.0
        %1432 = vmatprep.subr.mxu0 0.0
        %1433 = vmatpush1.xpose.msra.mxu0 0.0
        %1434 = vmatprep.mubr.f32.mxu0 0.0
        %1435 = vmatmul.mubr.f32.gmra.mrb[0].mxu0 %v1362
        %v1436 = vpop.f32.mrb[0].mxu0
        %v1437 = vadd.f32 0.0, %v1436
        %v1438 = vpop.f32.mrb[0].mxu0
        %1439 = vmatprep.mubr.f32.mxu0 0.0
        %1440 = vmatmul.mubr.f32.gmra.mrb[0].mxu0 %v1364
        %v1441 = vpop.f32.mrb[0].mxu0
        %v1442 = vadd.f32 0.0, %v1441
        %v1443 = vpop.f32.mrb[0].mxu0
        %1444 = vdwg.mxu0
        %v1445 = vmul.f32 %v1437, 0.25
        %v1446 = vmul.f32 %v1442, 0.25
        %v1447 = vsel %vm1248, -1e+30, %v1445
        %v1448 = vsel %vm1248, -1e+30, %v1446
        %v1449 = vsel %vm1152, %v1447, -inf
        %1450 = vmax.xlane.f32.xlu0 %v1449
        %v1451 = vpop.xlane.xlu0 %1450
        %v1452 = vsel %vm1152, %v1448, -inf
        %1453 = vmax.xlane.f32.xlu0 %v1452
        %v1454 = vpop.xlane.xlu0 %1453
        %v1455 = vsub.f32 %v1447, %v1451
        %v1456 = vsub.f32 %v1448, %v1454
        %v1457 = vmul.f32 %v1455, 1.442695
        %v1458 = vpow.pop %v1457
        %v1459 = vmul.f32 %v1456, 1.442695
        %v1460 = vpow.pop %v1459
        %v1461 = vsel %vm1152, %v1458, 0.0
        %1462 = vadd.xlane.f32.xlu0 %v1461
        %v1463 = vpop.xlane.xlu0 %1462
        %v1464 = vsel %vm1152, %v1460, 0.0
        %1465 = vadd.xlane.f32.xlu0 %v1464
        %v1466 = vpop.xlane.xlu0 %1465
        %v1467 = vrcp.pop %v1463
        %v1468 = vrcp.pop %v1466
        %v1469 = vmul.f32 %v1458, %v1467
        %v1470 = vmul.f32 %v1460, %v1468
        %1473 = vrot.lane.b32.xlu0 %v1134, 112
        %v1474 = vpop.permute.xlu0 %1473
        %1475 = vrot.lane.b32.xlu0 %v1139, 112
        %v1476 = vpop.permute.xlu0 %1475
        %v1480 = vsel %vm1152, %v1469, 0
        %v1483 = vsel %vm1152, %v1470, 0
        %1485 = vmatprep.subr.mxu0 0.0
        %1486 = vmatpush1.msra.mxu0 %v1474
        %1487 = vmatprep.subr.mxu0 0.0
        %1488 = vmatpush1.msra.mxu0 %v1476
        %1489 = vmatprep.subr.mxu0 0.0
        %1490 = vmatpush1.msra.mxu0 0.0
        %1491 = vmatprep.subr.mxu0 0.0
        %1492 = vmatpush1.msra.mxu0 0.0
        %1493 = vmatprep.subr.mxu0 0.0
        %1494 = vmatpush1.msra.mxu0 0.0
        %1495 = vmatprep.subr.mxu0 0.0
        %1496 = vmatpush1.msra.mxu0 0.0
        %1497 = vmatprep.subr.mxu0 0.0
        %1498 = vmatpush1.msra.mxu0 0.0
        %1499 = vmatprep.subr.mxu0 0.0
        %1500 = vmatpush1.msra.mxu0 0.0
        %1501 = vmatprep.subr.mxu0 0.0
        %1502 = vmatpush1.msra.mxu0 0.0
        %1503 = vmatprep.subr.mxu0 0.0
        %1504 = vmatpush1.msra.mxu0 0.0
        %1505 = vmatprep.subr.mxu0 0.0
        %1506 = vmatpush1.msra.mxu0 0.0
        %1507 = vmatprep.subr.mxu0 0.0
        %1508 = vmatpush1.msra.mxu0 0.0
        %1509 = vmatprep.subr.mxu0 0.0
        %1510 = vmatpush1.msra.mxu0 0.0
        %1511 = vmatprep.subr.mxu0 0.0
        %1512 = vmatpush1.msra.mxu0 0.0
        %1513 = vmatprep.subr.mxu0 0.0
        %1514 = vmatpush1.msra.mxu0 0.0
        %1515 = vmatprep.subr.mxu0 0.0
        %1516 = vmatpush1.msra.mxu0 0.0
        %1517 = vmatprep.subr.mxu0 0.0
        %1518 = vmatpush1.msra.mxu0 0.0
        %1519 = vmatprep.subr.mxu0 0.0
        %1520 = vmatpush1.msra.mxu0 0.0
        %1521 = vmatprep.subr.mxu0 0.0
        %1522 = vmatpush1.msra.mxu0 0.0
        %1523 = vmatprep.subr.mxu0 0.0
        %1524 = vmatpush1.msra.mxu0 0.0
        %1525 = vmatprep.subr.mxu0 0.0
        %1526 = vmatpush1.msra.mxu0 0.0
        %1527 = vmatprep.subr.mxu0 0.0
        %1528 = vmatpush1.msra.mxu0 0.0
        %1529 = vmatprep.subr.mxu0 0.0
        %1530 = vmatpush1.msra.mxu0 0.0
        %1531 = vmatprep.subr.mxu0 0.0
        %1532 = vmatpush1.msra.mxu0 0.0
        %1533 = vmatprep.subr.mxu0 0.0
        %1534 = vmatpush1.msra.mxu0 0.0
        %1535 = vmatprep.subr.mxu0 0.0
        %1536 = vmatpush1.msra.mxu0 0.0
        %1537 = vmatprep.subr.mxu0 0.0
        %1538 = vmatpush1.msra.mxu0 0.0
        %1539 = vmatprep.subr.mxu0 0.0
        %1540 = vmatpush1.msra.mxu0 0.0
        %1541 = vmatprep.subr.mxu0 0.0
        %1542 = vmatpush1.msra.mxu0 0.0
        %1543 = vmatprep.subr.mxu0 0.0
        %1544 = vmatpush1.msra.mxu0 0.0
        %1545 = vmatprep.subr.mxu0 0.0
        %1546 = vmatpush1.msra.mxu0 0.0
        %1547 = vmatprep.subr.mxu0 0.0
        %1548 = vmatpush1.msra.mxu0 0.0
        %1549 = vmatprep.mubr.f32.mxu0 0.0
        %1550 = vmatmul.mubr.f32.gmra.mrb[0].mxu0 %v1480
        %v1551 = vpop.f32.mrb[0].mxu0
        %v1552 = vadd.f32 0.0, %v1551
        %v1553 = vpop.f32.mrb[0].mxu0
        %1554 = vmatprep.mubr.f32.mxu0 0.0
        %1555 = vmatmul.mubr.f32.gmra.mrb[0].mxu0 %v1483
        %v1556 = vpop.f32.mrb[0].mxu0
        %v1557 = vadd.f32 0.0, %v1556
        %v1558 = vpop.f32.mrb[0].mxu0
        %1559 = vdwg.mxu0
        %1562 = vrot.lane.b32.xlu0 %v1552, 16
        %v1563 = vpop.permute.xlu0 %1562
        %1564 = vrot.lane.b32.xlu0 %v1557, 16
        %v1565 = vpop.permute.xlu0 %1564
        %v1568 = vsel %vm1152, %v1346, %v1563
        %v1569 = vsel %vm1152, %v1351, %v1565
        %v1571 = vsel %vm1152, %v952, 0
        %v1574 = vsel %vm1152, %v957, 0
        %v1577 = vsel %vm1152, %v1048, 0
        %v1580 = vsel %vm1152, %v1053, 0
        %1582 = vmatprep.subr.mxu0 0.0
        %1583 = vmatpush1.xpose.msra.mxu0 %v1577
        %1584 = vmatprep.subr.mxu0 0.0
        %1585 = vmatpush1.xpose.msra.mxu0 %v1580
        %1586 = vmatprep.subr.mxu0 0.0
        %1587 = vmatpush1.xpose.msra.mxu0 0.0
        %1588 = vmatprep.subr.mxu0 0.0
        %1589 = vmatpush1.xpose.msra.mxu0 0.0
        %1590 = vmatprep.subr.mxu0 0.0
        %1591 = vmatpush1.xpose.msra.mxu0 0.0
        %1592 = vmatprep.subr.mxu0 0.0
        %1593 = vmatpush1.xpose.msra.mxu0 0.0
        %1594 = vmatprep.subr.mxu0 0.0
        %1595 = vmatpush1.xpose.msra.mxu0 0.0
        %1596 = vmatprep.subr.mxu0 0.0
        %1597 = vmatpush1.xpose.msra.mxu0 0.0
        %1598 = vmatprep.subr.mxu0 0.0
        %1599 = vmatpush1.xpose.msra.mxu0 0.0
        %1600 = vmatprep.subr.mxu0 0.0
        %1601 = vmatpush1.xpose.msra.mxu0 0.0
        %1602 = vmatprep.subr.mxu0 0.0
        %1603 = vmatpush1.xpose.msra.mxu0 0.0
        %1604 = vmatprep.subr.mxu0 0.0
        %1605 = vmatpush1.xpose.msra.mxu0 0.0
        %1606 = vmatprep.subr.mxu0 0.0
        %1607 = vmatpush1.xpose.msra.mxu0 0.0
        %1608 = vmatprep.subr.mxu0 0.0
        %1609 = vmatpush1.xpose.msra.mxu0 0.0
        %1610 = vmatprep.subr.mxu0 0.0
        %1611 = vmatpush1.xpose.msra.mxu0 0.0
        %1612 = vmatprep.subr.mxu0 0.0
        %1613 = vmatpush1.xpose.msra.mxu0 0.0
        %1614 = vmatprep.subr.mxu0 0.0
        %1615 = vmatpush1.xpose.msra.mxu0 0.0
        %1616 = vmatprep.subr.mxu0 0.0
        %1617 = vmatpush1.xpose.msra.mxu0 0.0
        %1618 = vmatprep.subr.mxu0 0.0
        %1619 = vmatpush1.xpose.msra.mxu0 0.0
        %1620 = vmatprep.subr.mxu0 0.0
        %1621 = vmatpush1.xpose.msra.mxu0 0.0
        %1622 = vmatprep.subr.mxu0 0.0
        %1623 = vmatpush1.xpose.msra.mxu0 0.0
        %1624 = vmatprep.subr.mxu0 0.0
        %1625 = vmatpush1.xpose.msra.mxu0 0.0
        %1626 = vmatprep.subr.mxu0 0.0
        %1627 = vmatpush1.xpose.msra.mxu0 0.0
        %1628 = vmatprep.subr.mxu0 0.0
        %1629 = vmatpush1.xpose.msra.mxu0 0.0
        %1630 = vmatprep.subr.mxu0 0.0
        %1631 = vmatpush1.xpose.msra.mxu0 0.0
        %1632 = vmatprep.subr.mxu0 0.0
        %1633 = vmatpush1.xpose.msra.mxu0 0.0
        %1634 = vmatprep.subr.mxu0 0.0
        %1635 = vmatpush1.xpose.msra.mxu0 0.0
        %1636 = vmatprep.subr.mxu0 0.0
        %1637 = vmatpush1.xpose.msra.mxu0 0.0
        %1638 = vmatprep.subr.mxu0 0.0
        %1639 = vmatpush1.xpose.msra.mxu0 0.0
        %1640 = vmatprep.subr.mxu0 0.0
        %1641 = vmatpush1.xpose.msra.mxu0 0.0
        %1642 = vmatprep.subr.mxu0 0.0
        %1643 = vmatpush1.xpose.msra.mxu0 0.0
        %1644 = vmatprep.subr.mxu0 0.0
        %1645 = vmatpush1.xpose.msra.mxu0 0.0
        %1646 = vmatprep.mubr.f32.mxu0 0.0
        %1647 = vmatmul.mubr.f32.gmra.mrb[0].mxu0 %v1571
        %v1648 = vpop.f32.mrb[0].mxu0
        %v1649 = vadd.f32 0.0, %v1648
        %v1650 = vpop.f32.mrb[0].mxu0
        %1651 = vmatprep.mubr.f32.mxu0 0.0
        %1652 = vmatmul.mubr.f32.gmra.mrb[0].mxu0 %v1574
        %v1653 = vpop.f32.mrb[0].mxu0
        %v1654 = vadd.f32 0.0, %v1653
        %v1655 = vpop.f32.mrb[0].mxu0
        %1656 = vdwg.mxu0
        %v1657 = vmul.f32 %v1649, 0.25
        %v1658 = vmul.f32 %v1654, 0.25
        %v1659 = vlaneseq
        %v1660 = vshrl.u32 %v1659, 7
        %v1661 = vsub.s32 1, %v1660
        %v1662 = vrot.slane %v1243, %v1661
        %vm1663 = vcmp.eq.s32.totalorder %v1662, 1
        %v1664 = vsel %vm1663, -1e+30, %v1657
        %v1665 = vsel %vm1663, -1e+30, %v1658
        %v1666 = vsel %vm1152, %v1664, -inf
        %1667 = vmax.xlane.f32.xlu0 %v1666
        %v1668 = vpop.xlane.xlu0 %1667
        %v1669 = vsel %vm1152, %v1665, -inf
        %1670 = vmax.xlane.f32.xlu0 %v1669
        %v1671 = vpop.xlane.xlu0 %1670
        %v1672 = vsub.f32 %v1664, %v1668
        %v1673 = vsub.f32 %v1665, %v1671
        %v1674 = vmul.f32 %v1672, 1.442695
        %v1675 = vpow.pop %v1674
        %v1676 = vmul.f32 %v1673, 1.442695
        %v1677 = vpow.pop %v1676
        %v1678 = vsel %vm1152, %v1675, 0.0
        %1679 = vadd.xlane.f32.xlu0 %v1678
        %v1680 = vpop.xlane.xlu0 %1679
        %v1681 = vsel %vm1152, %v1677, 0.0
        %1682 = vadd.xlane.f32.xlu0 %v1681
        %v1683 = vpop.xlane.xlu0 %1682
        %v1684 = vrcp.pop %v1680
        %v1685 = vrcp.pop %v1683
        %v1686 = vmul.f32 %v1675, %v1684
        %v1687 = vmul.f32 %v1677, %v1685
        %v1689 = vsel %vm1152, %v1686, 0
        %v1692 = vsel %vm1152, %v1687, 0
        %1694 = vmatprep.subr.mxu0 0.0
        %1695 = vmatpush1.msra.mxu0 %v1144
        %1696 = vmatprep.subr.mxu0 0.0
        %1697 = vmatpush1.msra.mxu0 %v1149
        %1698 = vmatprep.subr.mxu0 0.0
        %1699 = vmatpush1.msra.mxu0 0.0
        %1700 = vmatprep.subr.mxu0 0.0
        %1701 = vmatpush1.msra.mxu0 0.0
        %1702 = vmatprep.subr.mxu0 0.0
        %1703 = vmatpush1.msra.mxu0 0.0
        %1704 = vmatprep.subr.mxu0 0.0
        %1705 = vmatpush1.msra.mxu0 0.0
        %1706 = vmatprep.subr.mxu0 0.0
        %1707 = vmatpush1.msra.mxu0 0.0
        %1708 = vmatprep.subr.mxu0 0.0
        %1709 = vmatpush1.msra.mxu0 0.0
        %1710 = vmatprep.subr.mxu0 0.0
        %1711 = vmatpush1.msra.mxu0 0.0
        %1712 = vmatprep.subr.mxu0 0.0
        %1713 = vmatpush1.msra.mxu0 0.0
        %1714 = vmatprep.subr.mxu0 0.0
        %1715 = vmatpush1.msra.mxu0 0.0
        %1716 = vmatprep.subr.mxu0 0.0
        %1717 = vmatpush1.msra.mxu0 0.0
        %1718 = vmatprep.subr.mxu0 0.0
        %1719 = vmatpush1.msra.mxu0 0.0
        %1720 = vmatprep.subr.mxu0 0.0
        %1721 = vmatpush1.msra.mxu0 0.0
        %1722 = vmatprep.subr.mxu0 0.0
        %1723 = vmatpush1.msra.mxu0 0.0
        %1724 = vmatprep.subr.mxu0 0.0
        %1725 = vmatpush1.msra.mxu0 0.0
        %1726 = vmatprep.subr.mxu0 0.0
        %1727 = vmatpush1.msra.mxu0 0.0
        %1728 = vmatprep.subr.mxu0 0.0
        %1729 = vmatpush1.msra.mxu0 0.0
        %1730 = vmatprep.subr.mxu0 0.0
        %1731 = vmatpush1.msra.mxu0 0.0
        %1732 = vmatprep.subr.mxu0 0.0
        %1733 = vmatpush1.msra.mxu0 0.0
        %1734 = vmatprep.subr.mxu0 0.0
        %1735 = vmatpush1.msra.mxu0 0.0
        %1736 = vmatprep.subr.mxu0 0.0
        %1737 = vmatpush1.msra.mxu0 0.0
        %1738 = vmatprep.subr.mxu0 0.0
        %1739 = vmatpush1.msra.mxu0 0.0
        %1740 = vmatprep.subr.mxu0 0.0
        %1741 = vmatpush1.msra.mxu0 0.0
        %1742 = vmatprep.subr.mxu0 0.0
        %1743 = vmatpush1.msra.mxu0 0.0
        %1744 = vmatprep.subr.mxu0 0.0
        %1745 = vmatpush1.msra.mxu0 0.0
        %1746 = vmatprep.subr.mxu0 0.0
        %1747 = vmatpush1.msra.mxu0 0.0
        %1748 = vmatprep.subr.mxu0 0.0
        %1749 = vmatpush1.msra.mxu0 0.0
        %1750 = vmatprep.subr.mxu0 0.0
        %1751 = vmatpush1.msra.mxu0 0.0
        %1752 = vmatprep.subr.mxu0 0.0
        %1753 = vmatpush1.msra.mxu0 0.0
        %1754 = vmatprep.subr.mxu0 0.0
        %1755 = vmatpush1.msra.mxu0 0.0
        %1756 = vmatprep.subr.mxu0 0.0
        %1757 = vmatpush1.msra.mxu0 0.0
        %1758 = vmatprep.mubr.f32.mxu0 0.0
        %1759 = vmatmul.mubr.f32.gmra.mrb[0].mxu0 %v1689
        %v1760 = vpop.f32.mrb[0].mxu0
        %v1761 = vadd.f32 0.0, %v1760
        %v1762 = vpop.f32.mrb[0].mxu0
        %1763 = vmatprep.mubr.f32.mxu0 0.0
        %1764 = vmatmul.mubr.f32.gmra.mrb[0].mxu0 %v1692
        %v1765 = vpop.f32.mrb[0].mxu0
        %v1766 = vadd.f32 0.0, %v1765
        %v1767 = vpop.f32.mrb[0].mxu0
        %1768 = vdwg.mxu0
        %1769 = vrot.lane.b32.xlu0 %v952, 112
        %v1770 = vpop.permute.xlu0 %1769
        %1771 = vrot.lane.b32.xlu0 %v957, 112
        %v1772 = vpop.permute.xlu0 %1771
        %1773 = vrot.lane.b32.xlu0 %v1048, 112
        %v1774 = vpop.permute.xlu0 %1773
        %1775 = vrot.lane.b32.xlu0 %v1053, 112
        %v1776 = vpop.permute.xlu0 %1775
        %v1777 = vsel %vm1152, %v1770, 0
        %v1779 = vsel %vm1152, %v1772, 0
        %v1781 = vsel %vm1152, %v1774, 0
        %v1783 = vsel %vm1152, %v1776, 0
        %1785 = vmatprep.subr.mxu0 0.0
        %1786 = vmatpush1.xpose.msra.mxu0 %v1781
        %1787 = vmatprep.subr.mxu0 0.0
        %1788 = vmatpush1.xpose.msra.mxu0 %v1783
        %1789 = vmatprep.subr.mxu0 0.0
        %1790 = vmatpush1.xpose.msra.mxu0 0.0
        %1791 = vmatprep.subr.mxu0 0.0
        %1792 = vmatpush1.xpose.msra.mxu0 0.0
        %1793 = vmatprep.subr.mxu0 0.0
        %1794 = vmatpush1.xpose.msra.mxu0 0.0
        %1795 = vmatprep.subr.mxu0 0.0
        %1796 = vmatpush1.xpose.msra.mxu0 0.0
        %1797 = vmatprep.subr.mxu0 0.0
        %1798 = vmatpush1.xpose.msra.mxu0 0.0
        %1799 = vmatprep.subr.mxu0 0.0
        %1800 = vmatpush1.xpose.msra.mxu0 0.0
        %1801 = vmatprep.subr.mxu0 0.0
        %1802 = vmatpush1.xpose.msra.mxu0 0.0
        %1803 = vmatprep.subr.mxu0 0.0
        %1804 = vmatpush1.xpose.msra.mxu0 0.0
        %1805 = vmatprep.subr.mxu0 0.0
        %1806 = vmatpush1.xpose.msra.mxu0 0.0
        %1807 = vmatprep.subr.mxu0 0.0
        %1808 = vmatpush1.xpose.msra.mxu0 0.0
        %1809 = vmatprep.subr.mxu0 0.0
        %1810 = vmatpush1.xpose.msra.mxu0 0.0
        %1811 = vmatprep.subr.mxu0 0.0
        %1812 = vmatpush1.xpose.msra.mxu0 0.0
        %1813 = vmatprep.subr.mxu0 0.0
        %1814 = vmatpush1.xpose.msra.mxu0 0.0
        %1815 = vmatprep.subr.mxu0 0.0
        %1816 = vmatpush1.xpose.msra.mxu0 0.0
        %1817 = vmatprep.subr.mxu0 0.0
        %1818 = vmatpush1.xpose.msra.mxu0 0.0
        %1819 = vmatprep.subr.mxu0 0.0
        %1820 = vmatpush1.xpose.msra.mxu0 0.0
        %1821 = vmatprep.subr.mxu0 0.0
        %1822 = vmatpush1.xpose.msra.mxu0 0.0
        %1823 = vmatprep.subr.mxu0 0.0
        %1824 = vmatpush1.xpose.msra.mxu0 0.0
        %1825 = vmatprep.subr.mxu0 0.0
        %1826 = vmatpush1.xpose.msra.mxu0 0.0
        %1827 = vmatprep.subr.mxu0 0.0
        %1828 = vmatpush1.xpose.msra.mxu0 0.0
        %1829 = vmatprep.subr.mxu0 0.0
        %1830 = vmatpush1.xpose.msra.mxu0 0.0
        %1831 = vmatprep.subr.mxu0 0.0
        %1832 = vmatpush1.xpose.msra.mxu0 0.0
        %1833 = vmatprep.subr.mxu0 0.0
        %1834 = vmatpush1.xpose.msra.mxu0 0.0
        %1835 = vmatprep.subr.mxu0 0.0
        %1836 = vmatpush1.xpose.msra.mxu0 0.0
        %1837 = vmatprep.subr.mxu0 0.0
        %1838 = vmatpush1.xpose.msra.mxu0 0.0
        %1839 = vmatprep.subr.mxu0 0.0
        %1840 = vmatpush1.xpose.msra.mxu0 0.0
        %1841 = vmatprep.subr.mxu0 0.0
        %1842 = vmatpush1.xpose.msra.mxu0 0.0
        %1843 = vmatprep.subr.mxu0 0.0
        %1844 = vmatpush1.xpose.msra.mxu0 0.0
        %1845 = vmatprep.subr.mxu0 0.0
        %1846 = vmatpush1.xpose.msra.mxu0 0.0
        %1847 = vmatprep.subr.mxu0 0.0
        %1848 = vmatpush1.xpose.msra.mxu0 0.0
        %1849 = vmatprep.mubr.f32.mxu0 0.0
        %1850 = vmatmul.mubr.f32.gmra.mrb[0].mxu0 %v1777
        %v1851 = vpop.f32.mrb[0].mxu0
        %v1852 = vadd.f32 0.0, %v1851
        %v1853 = vpop.f32.mrb[0].mxu0
        %1854 = vmatprep.mubr.f32.mxu0 0.0
        %1855 = vmatmul.mubr.f32.gmra.mrb[0].mxu0 %v1779
        %v1856 = vpop.f32.mrb[0].mxu0
        %v1857 = vadd.f32 0.0, %v1856
        %v1858 = vpop.f32.mrb[0].mxu0
        %1859 = vdwg.mxu0
        %v1860 = vmul.f32 %v1852, 0.25
        %v1861 = vmul.f32 %v1857, 0.25
        %v1862 = vsel %vm1663, -1e+30, %v1860
        %v1863 = vsel %vm1663, -1e+30, %v1861
        %v1864 = vsel %vm1152, %v1862, -inf
        %1865 = vmax.xlane.f32.xlu0 %v1864
        %v1866 = vpop.xlane.xlu0 %1865
        %v1867 = vsel %vm1152, %v1863, -inf
        %1868 = vmax.xlane.f32.xlu0 %v1867
        %v1869 = vpop.xlane.xlu0 %1868
        %v1870 = vsub.f32 %v1862, %v1866
        %v1871 = vsub.f32 %v1863, %v1869
        %v1872 = vmul.f32 %v1870, 1.442695
        %v1873 = vpow.pop %v1872
        %v1874 = vmul.f32 %v1871, 1.442695
        %v1875 = vpow.pop %v1874
        %v1876 = vsel %vm1152, %v1873, 0.0
        %1877 = vadd.xlane.f32.xlu0 %v1876
        %v1878 = vpop.xlane.xlu0 %1877
        %v1879 = vsel %vm1152, %v1875, 0.0
        %1880 = vadd.xlane.f32.xlu0 %v1879
        %v1881 = vpop.xlane.xlu0 %1880
        %v1882 = vrcp.pop %v1878
        %v1883 = vrcp.pop %v1881
        %v1884 = vmul.f32 %v1873, %v1882
        %v1885 = vmul.f32 %v1875, %v1883
        %1888 = vrot.lane.b32.xlu0 %v1144, 112
        %v1889 = vpop.permute.xlu0 %1888
        %1890 = vrot.lane.b32.xlu0 %v1149, 112
        %v1891 = vpop.permute.xlu0 %1890
        %v1895 = vsel %vm1152, %v1884, 0
        %v1898 = vsel %vm1152, %v1885, 0
        %1900 = vmatprep.subr.mxu0 0.0
        %1901 = vmatpush1.msra.mxu0 %v1889
        %1902 = vmatprep.subr.mxu0 0.0
        %1903 = vmatpush1.msra.mxu0 %v1891
        %1904 = vmatprep.subr.mxu0 0.0
        %1905 = vmatpush1.msra.mxu0 0.0
        %1906 = vmatprep.subr.mxu0 0.0
        %1907 = vmatpush1.msra.mxu0 0.0
        %1908 = vmatprep.subr.mxu0 0.0
        %1909 = vmatpush1.msra.mxu0 0.0
        %1910 = vmatprep.subr.mxu0 0.0
        %1911 = vmatpush1.msra.mxu0 0.0
        %1912 = vmatprep.subr.mxu0 0.0
        %1913 = vmatpush1.msra.mxu0 0.0
        %1914 = vmatprep.subr.mxu0 0.0
        %1915 = vmatpush1.msra.mxu0 0.0
        %1916 = vmatprep.subr.mxu0 0.0
        %1917 = vmatpush1.msra.mxu0 0.0
        %1918 = vmatprep.subr.mxu0 0.0
        %1919 = vmatpush1.msra.mxu0 0.0
        %1920 = vmatprep.subr.mxu0 0.0
        %1921 = vmatpush1.msra.mxu0 0.0
        %1922 = vmatprep.subr.mxu0 0.0
        %1923 = vmatpush1.msra.mxu0 0.0
        %1924 = vmatprep.subr.mxu0 0.0
        %1925 = vmatpush1.msra.mxu0 0.0
        %1926 = vmatprep.subr.mxu0 0.0
        %1927 = vmatpush1.msra.mxu0 0.0
        %1928 = vmatprep.subr.mxu0 0.0
        %1929 = vmatpush1.msra.mxu0 0.0
        %1930 = vmatprep.subr.mxu0 0.0
        %1931 = vmatpush1.msra.mxu0 0.0
        %1932 = vmatprep.subr.mxu0 0.0
        %1933 = vmatpush1.msra.mxu0 0.0
        %1934 = vmatprep.subr.mxu0 0.0
        %1935 = vmatpush1.msra.mxu0 0.0
        %1936 = vmatprep.subr.mxu0 0.0
        %1937 = vmatpush1.msra.mxu0 0.0
        %1938 = vmatprep.subr.mxu0 0.0
        %1939 = vmatpush1.msra.mxu0 0.0
        %1940 = vmatprep.subr.mxu0 0.0
        %1941 = vmatpush1.msra.mxu0 0.0
        %1942 = vmatprep.subr.mxu0 0.0
        %1943 = vmatpush1.msra.mxu0 0.0
        %1944 = vmatprep.subr.mxu0 0.0
        %1945 = vmatpush1.msra.mxu0 0.0
        %1946 = vmatprep.subr.mxu0 0.0
        %1947 = vmatpush1.msra.mxu0 0.0
        %1948 = vmatprep.subr.mxu0 0.0
        %1949 = vmatpush1.msra.mxu0 0.0
        %1950 = vmatprep.subr.mxu0 0.0
        %1951 = vmatpush1.msra.mxu0 0.0
        %1952 = vmatprep.subr.mxu0 0.0
        %1953 = vmatpush1.msra.mxu0 0.0
        %1954 = vmatprep.subr.mxu0 0.0
        %1955 = vmatpush1.msra.mxu0 0.0
        %1956 = vmatprep.subr.mxu0 0.0
        %1957 = vmatpush1.msra.mxu0 0.0
        %1958 = vmatprep.subr.mxu0 0.0
        %1959 = vmatpush1.msra.mxu0 0.0
        %1960 = vmatprep.subr.mxu0 0.0
        %1961 = vmatpush1.msra.mxu0 0.0
        %1962 = vmatprep.subr.mxu0 0.0
        %1963 = vmatpush1.msra.mxu0 0.0
        %1964 = vmatprep.mubr.f32.mxu0 0.0
        %1965 = vmatmul.mubr.f32.gmra.mrb[0].mxu0 %v1895
        %v1966 = vpop.f32.mrb[0].mxu0
        %v1967 = vadd.f32 0.0, %v1966
        %v1968 = vpop.f32.mrb[0].mxu0
        %1969 = vmatprep.mubr.f32.mxu0 0.0
        %1970 = vmatmul.mubr.f32.gmra.mrb[0].mxu0 %v1898
        %v1971 = vpop.f32.mrb[0].mxu0
        %v1972 = vadd.f32 0.0, %v1971
        %v1973 = vpop.f32.mrb[0].mxu0
        %1974 = vdwg.mxu0
        %1977 = vrot.lane.b32.xlu0 %v1967, 16
        %v1978 = vpop.permute.xlu0 %1977
        %1979 = vrot.lane.b32.xlu0 %v1972, 16
        %v1980 = vpop.permute.xlu0 %1979
        %v1983 = vsel %vm1152, %v1761, %v1978
        %v1984 = vsel %vm1152, %v1766, %v1980
        %v1985 = vld [vmem:[%s797] sm:$0xff]
        %v1986 = vld [vmem:[%s797 + $0x8] sm:$0xff]
        %v1987 = vld [vmem:[%s797 + $0x10] sm:$0xff]
        %v1988 = vld [vmem:[%s797 + $0x18] sm:$0xff]
        %v1989 = vld [vmem:[%s800] sm:$0x1]
        %v1991 = vlaneseq
        %v1992 = vshrl.u32 %v1991, 7
        %v1993 = vsub.s32 0, %v1992
        %v1994 = vrot.slane %v1989, %v1993
        %v1997 = vsel %vm862, %v1568, 0
        %v2000 = vsel %vm862, %v1569, 0
        %v2003 = vsel %vm862, %v1983, 0
        %v2006 = vsel %vm862, %v1984, 0
        %2008 = vmatprep.subr.mxu0 0.0
        %2009 = vmatpush1.msra.mxu0 %v1985
        %2010 = vmatprep.subr.mxu0 0.0
        %2011 = vmatpush1.msra.mxu0 %v1986
        %2012 = vmatprep.subr.mxu0 0.0
        %2013 = vmatpush1.msra.mxu0 %v1987
        %2014 = vmatprep.subr.mxu0 0.0
        %2015 = vmatpush1.msra.mxu0 %v1988
        %2016 = vmatprep.subr.mxu0 0.0
        %2017 = vmatpush1.msra.mxu0 0.0
        %2018 = vmatprep.subr.mxu0 0.0
        %2019 = vmatpush1.msra.mxu0 0.0
        %2020 = vmatprep.subr.mxu0 0.0
        %2021 = vmatpush1.msra.mxu0 0.0
        %2022 = vmatprep.subr.mxu0 0.0
        %2023 = vmatpush1.msra.mxu0 0.0
        %2024 = vmatprep.subr.mxu0 0.0
        %2025 = vmatpush1.msra.mxu0 0.0
        %2026 = vmatprep.subr.mxu0 0.0
        %2027 = vmatpush1.msra.mxu0 0.0
        %2028 = vmatprep.subr.mxu0 0.0
        %2029 = vmatpush1.msra.mxu0 0.0
        %2030 = vmatprep.subr.mxu0 0.0
        %2031 = vmatpush1.msra.mxu0 0.0
        %2032 = vmatprep.subr.mxu0 0.0
        %2033 = vmatpush1.msra.mxu0 0.0
        %2034 = vmatprep.subr.mxu0 0.0
        %2035 = vmatpush1.msra.mxu0 0.0
        %2036 = vmatprep.subr.mxu0 0.0
        %2037 = vmatpush1.msra.mxu0 0.0
        %2038 = vmatprep.subr.mxu0 0.0
        %2039 = vmatpush1.msra.mxu0 0.0
        %2040 = vmatprep.subr.mxu0 0.0
        %2041 = vmatpush1.msra.mxu0 0.0
        %2042 = vmatprep.subr.mxu0 0.0
        %2043 = vmatpush1.msra.mxu0 0.0
        %2044 = vmatprep.subr.mxu0 0.0
        %2045 = vmatpush1.msra.mxu0 0.0
        %2046 = vmatprep.subr.mxu0 0.0
        %2047 = vmatpush1.msra.mxu0 0.0
        %2048 = vmatprep.subr.mxu0 0.0
        %2049 = vmatpush1.msra.mxu0 0.0
        %2050 = vmatprep.subr.mxu0 0.0
        %2051 = vmatpush1.msra.mxu0 0.0
        %2052 = vmatprep.subr.mxu0 0.0
        %2053 = vmatpush1.msra.mxu0 0.0
        %2054 = vmatprep.subr.mxu0 0.0
        %2055 = vmatpush1.msra.mxu0 0.0
        %2056 = vmatprep.subr.mxu0 0.0
        %2057 = vmatpush1.msra.mxu0 0.0
        %2058 = vmatprep.subr.mxu0 0.0
        %2059 = vmatpush1.msra.mxu0 0.0
        %2060 = vmatprep.subr.mxu0 0.0
        %2061 = vmatpush1.msra.mxu0 0.0
        %2062 = vmatprep.subr.mxu0 0.0
        %2063 = vmatpush1.msra.mxu0 0.0
        %2064 = vmatprep.subr.mxu0 0.0
        %2065 = vmatpush1.msra.mxu0 0.0
        %2066 = vmatprep.subr.mxu0 0.0
        %2067 = vmatpush1.msra.mxu0 0.0
        %2068 = vmatprep.subr.mxu0 0.0
        %2069 = vmatpush1.msra.mxu0 0.0
        %2070 = vmatprep.subr.mxu0 0.0
        %2071 = vmatpush1.msra.mxu0 0.0
        %2072 = vmatprep.mubr.f32.mxu0 0.0
        %2073 = vmatmul.mubr.f32.gmra.mrb[0].mxu0 %v1997
        %v2074 = vpop.f32.mrb[0].mxu0
        %v2075 = vadd.f32 %v1994, %v2074
        %v2076 = vpop.f32.mrb[0].mxu0
        %2077 = vmatprep.mubr.f32.mxu0 0.0
        %2078 = vmatmul.mubr.f32.gmra.mrb[0].mxu0 %v2000
        %v2079 = vpop.f32.mrb[0].mxu0
        %v2080 = vadd.f32 %v1994, %v2079
        %v2081 = vpop.f32.mrb[0].mxu0
        %2082 = vmatprep.mubr.f32.mxu0 0.0
        %2083 = vmatmul.mubr.f32.gmra.mrb[0].mxu0 %v2003
        %v2084 = vpop.f32.mrb[0].mxu0
        %v2085 = vadd.f32 %v1994, %v2084
        %v2086 = vpop.f32.mrb[0].mxu0
        %2087 = vmatprep.mubr.f32.mxu0 0.0
        %2088 = vmatmul.mubr.f32.gmra.mrb[0].mxu0 %v2006
        %v2089 = vpop.f32.mrb[0].mxu0
        %v2090 = vadd.f32 %v1994, %v2089
        %v2091 = vpop.f32.mrb[0].mxu0
        %2092 = vdwg.mxu0
        %v2093 = vadd.f32 %v2075, %v842
        %v2094 = vadd.f32 %v2080, %v843
        %v2095 = vadd.f32 %v2085, %v844
        %v2096 = vadd.f32 %v2090, %v845
        %v2097 = vld [vmem:[%s803] sm:$0x1]
        %v2098 = vld [vmem:[%s806] sm:$0x1]
        %v2099 = vsel %vm862, %v2093, 0.0
        %2100 = vadd.xlane.f32.xlu0 %v2099
        %v2101 = vpop.xlane.xlu0 %2100
        %v2102 = vsel %vm862, %v2094, 0.0
        %2103 = vadd.xlane.f32.xlu0 %v2102
        %v2104 = vpop.xlane.xlu0 %2103
        %v2105 = vsel %vm862, %v2095, 0.0
        %2106 = vadd.xlane.f32.xlu0 %v2105
        %v2107 = vpop.xlane.xlu0 %2106
        %v2108 = vsel %vm862, %v2096, 0.0
        %2109 = vadd.xlane.f32.xlu0 %v2108
        %v2110 = vpop.xlane.xlu0 %2109
        %v2111 = vrcp.pop 32.0
        %v2112 = vmul.f32 %v2101, %v2111
        %v2113 = vmul.f32 %v2104, %v2111
        %v2114 = vmul.f32 %v2107, %v2111
        %v2115 = vmul.f32 %v2110, %v2111
        %v2116 = vsub.f32 %v2093, %v2112
        %v2117 = vsub.f32 %v2094, %v2113
        %v2118 = vsub.f32 %v2095, %v2114
        %v2119 = vsub.f32 %v2096, %v2115
        %v2120 = vmul.f32 %v2116, %v2116
        %v2121 = vmul.f32 %v2117, %v2117
        %v2122 = vmul.f32 %v2118, %v2118
        %v2123 = vmul.f32 %v2119, %v2119
        %v2124 = vsel %vm862, %v2120, 0.0
        %2125 = vadd.xlane.f32.xlu0 %v2124
        %v2126 = vpop.xlane.xlu0 %2125
        %v2127 = vsel %vm862, %v2121, 0.0
        %2128 = vadd.xlane.f32.xlu0 %v2127
        %v2129 = vpop.xlane.xlu0 %2128
        %v2130 = vsel %vm862, %v2122, 0.0
        %2131 = vadd.xlane.f32.xlu0 %v2130
        %v2132 = vpop.xlane.xlu0 %2131
        %v2133 = vsel %vm862, %v2123, 0.0
        %2134 = vadd.xlane.f32.xlu0 %v2133
        %v2135 = vpop.xlane.xlu0 %2134
        %v2136 = vmul.f32 %v2126, %v2111
        %v2137 = vmul.f32 %v2129, %v2111
        %v2138 = vmul.f32 %v2132, %v2111
        %v2139 = vmul.f32 %v2135, %v2111
        %v2140 = vadd.f32 %v2136, 1e-05
        %v2141 = vadd.f32 %v2137, 1e-05
        %v2142 = vadd.f32 %v2138, 1e-05
        %v2143 = vadd.f32 %v2139, 1e-05
        %v2144 = vrsqrt.pop %v2140
        %v2145 = vrsqrt.pop %v2141
        %v2146 = vrsqrt.pop %v2142
        %v2147 = vrsqrt.pop %v2143
        %v2148 = vmul.f32 %v2116, %v2144
        %v2149 = vmul.f32 %v2117, %v2145
        %v2150 = vmul.f32 %v2118, %v2146
        %v2151 = vmul.f32 %v2119, %v2147
        %v2153 = vlaneseq
        %v2154 = vshrl.u32 %v2153, 7
        %v2155 = vsub.s32 0, %v2154
        %v2156 = vrot.slane %v2097, %v2155
        %v2158 = vmul.f32 %v2148, %v2156
        %v2159 = vmul.f32 %v2149, %v2156
        %v2160 = vmul.f32 %v2150, %v2156
        %v2161 = vmul.f32 %v2151, %v2156
        %v2163 = vlaneseq
        %v2164 = vshrl.u32 %v2163, 7
        %v2165 = vsub.s32 0, %v2164
        %v2166 = vrot.slane %v2098, %v2165
        %v2168 = vadd.f32 %v2158, %v2166
        %v2169 = vadd.f32 %v2159, %v2166
        %v2170 = vadd.f32 %v2160, %v2166
        %v2171 = vadd.f32 %v2161, %v2166
        %2173 = vset.pattern.permute.xlu0 0
        %2174 = vperm.xlu0 %2173, %v846
        %v2175 = vpop.permute.xlu0 %2174
        %2178 = vset.pattern.permute.xlu0 0
        %2179 = vperm.xlu0 %2178, %v847
        %v2180 = vpop.permute.xlu0 %2179
        %2183 = vset.pattern.permute.xlu0 0
        %2184 = vperm.xlu0 %2183, %v848
        %v2185 = vpop.permute.xlu0 %2184
        %2188 = vset.pattern.permute.xlu0 0
        %2189 = vperm.xlu0 %2188, %v849
        %v2190 = vpop.permute.xlu0 %2189
        %v2192 = vmul.f32 %v2168, %v2175
        %v2193 = vmul.f32 %v2169, %v2180
        %v2194 = vmul.f32 %v2170, %v2185
        %v2195 = vmul.f32 %v2171, %v2190
        %v2196 = vld [vmem:[%s811] sm:$0xff]
        %v2197 = vld [vmem:[%s811 + $0x8] sm:$0xff]
        %v2198 = vld [vmem:[%s811 + $0x10] sm:$0xff]
        %v2199 = vld [vmem:[%s811 + $0x18] sm:$0xff]
        %v2200 = vld [vmem:[%s814] sm:$0x1]
        %v2202 = vlaneseq
        %v2203 = vshrl.u32 %v2202, 7
        %v2204 = vsub.s32 0, %v2203
        %v2205 = vrot.slane %v2200, %v2204
        %v2208 = vsel %vm862, %v2192, 0
        %v2211 = vsel %vm862, %v2193, 0
        %v2214 = vsel %vm862, %v2194, 0
        %v2217 = vsel %vm862, %v2195, 0
        %2219 = vmatprep.subr.mxu0 0.0
        %2220 = vmatpush1.msra.mxu0 %v2196
        %2221 = vmatprep.subr.mxu0 0.0
        %2222 = vmatpush1.msra.mxu0 %v2197
        %2223 = vmatprep.subr.mxu0 0.0
        %2224 = vmatpush1.msra.mxu0 %v2198
        %2225 = vmatprep.subr.mxu0 0.0
        %2226 = vmatpush1.msra.mxu0 %v2199
        %2227 = vmatprep.subr.mxu0 0.0
        %2228 = vmatpush1.msra.mxu0 0.0
        %2229 = vmatprep.subr.mxu0 0.0
        %2230 = vmatpush1.msra.mxu0 0.0
        %2231 = vmatprep.subr.mxu0 0.0
        %2232 = vmatpush1.msra.mxu0 0.0
        %2233 = vmatprep.subr.mxu0 0.0
        %2234 = vmatpush1.msra.mxu0 0.0
        %2235 = vmatprep.subr.mxu0 0.0
        %2236 = vmatpush1.msra.mxu0 0.0
        %2237 = vmatprep.subr.mxu0 0.0
        %2238 = vmatpush1.msra.mxu0 0.0
        %2239 = vmatprep.subr.mxu0 0.0
        %2240 = vmatpush1.msra.mxu0 0.0
        %2241 = vmatprep.subr.mxu0 0.0
        %2242 = vmatpush1.msra.mxu0 0.0
        %2243 = vmatprep.subr.mxu0 0.0
        %2244 = vmatpush1.msra.mxu0 0.0
        %2245 = vmatprep.subr.mxu0 0.0
        %2246 = vmatpush1.msra.mxu0 0.0
        %2247 = vmatprep.subr.mxu0 0.0
        %2248 = vmatpush1.msra.mxu0 0.0
        %2249 = vmatprep.subr.mxu0 0.0
        %2250 = vmatpush1.msra.mxu0 0.0
        %2251 = vmatprep.subr.mxu0 0.0
        %2252 = vmatpush1.msra.mxu0 0.0
        %2253 = vmatprep.subr.mxu0 0.0
        %2254 = vmatpush1.msra.mxu0 0.0
        %2255 = vmatprep.subr.mxu0 0.0
        %2256 = vmatpush1.msra.mxu0 0.0
        %2257 = vmatprep.subr.mxu0 0.0
        %2258 = vmatpush1.msra.mxu0 0.0
        %2259 = vmatprep.subr.mxu0 0.0
        %2260 = vmatpush1.msra.mxu0 0.0
        %2261 = vmatprep.subr.mxu0 0.0
        %2262 = vmatpush1.msra.mxu0 0.0
        %2263 = vmatprep.subr.mxu0 0.0
        %2264 = vmatpush1.msra.mxu0 0.0
        %2265 = vmatprep.subr.mxu0 0.0
        %2266 = vmatpush1.msra.mxu0 0.0
        %2267 = vmatprep.subr.mxu0 0.0
        %2268 = vmatpush1.msra.mxu0 0.0
        %2269 = vmatprep.subr.mxu0 0.0
        %2270 = vmatpush1.msra.mxu0 0.0
        %2271 = vmatprep.subr.mxu0 0.0
        %2272 = vmatpush1.msra.mxu0 0.0
        %2273 = vmatprep.subr.mxu0 0.0
        %2274 = vmatpush1.msra.mxu0 0.0
        %2275 = vmatprep.subr.mxu0 0.0
        %2276 = vmatpush1.msra.mxu0 0.0
        %2277 = vmatprep.subr.mxu0 0.0
        %2278 = vmatpush1.msra.mxu0 0.0
        %2279 = vmatprep.subr.mxu0 0.0
        %2280 = vmatpush1.msra.mxu0 0.0
        %2281 = vmatprep.subr.mxu0 0.0
        %2282 = vmatpush1.msra.mxu0 0.0
        %2283 = vmatprep.mubr.f32.mxu0 0.0
        %2284 = vmatmul.mubr.f32.gmra.mrb[0].mxu0 %v2208
        %v2285 = vpop.f32.mrb[0].mxu0
        %v2286 = vadd.f32 %v2205, %v2285
        %v2287 = vpop.f32.mrb[0].mxu0
        %2288 = vmatprep.mubr.f32.mxu0 0.0
        %2289 = vmatmul.mubr.f32.gmra.mrb[0].mxu0 %v2211
        %v2290 = vpop.f32.mrb[0].mxu0
        %v2291 = vadd.f32 %v2205, %v2290
        %v2292 = vpop.f32.mrb[0].mxu0
        %2293 = vmatprep.mubr.f32.mxu0 0.0
        %2294 = vmatmul.mubr.f32.gmra.mrb[0].mxu0 %v2214
        %v2295 = vpop.f32.mrb[0].mxu0
        %v2296 = vadd.f32 %v2205, %v2295
        %v2297 = vpop.f32.mrb[0].mxu0
        %2298 = vmatprep.mubr.f32.mxu0 0.0
        %2299 = vmatmul.mubr.f32.gmra.mrb[0].mxu0 %v2217
        %v2300 = vpop.f32.mrb[0].mxu0
        %v2301 = vadd.f32 %v2205, %v2300
        %v2302 = vpop.f32.mrb[0].mxu0
        %2303 = vdwg.mxu0
        %v2304 = vmax.f32 %v2286, 0.0
        %v2305 = vmax.f32 %v2291, 0.0
        %v2306 = vmax.f32 %v2296, 0.0
        %v2307 = vmax.f32 %v2301, 0.0
        %v2308 = vld [vmem:[%s819] sm:$0xff]
        %v2309 = vld [vmem:[%s819 + $0x8] sm:$0xff]
        %v2310 = vld [vmem:[%s819 + $0x10] sm:$0xff]
        %v2311 = vld [vmem:[%s819 + $0x18] sm:$0xff]
        %v2312 = vld [vmem:[%s819 + $0x20] sm:$0xff]
        %v2313 = vld [vmem:[%s819 + $0x28] sm:$0xff]
        %v2314 = vld [vmem:[%s819 + $0x30] sm:$0xff]
        %v2315 = vld [vmem:[%s819 + $0x38] sm:$0xff]
        %v2316 = vld [vmem:[%s822] sm:$0x1]
        %v2318 = vlaneseq
        %v2319 = vshrl.u32 %v2318, 7
        %v2320 = vsub.s32 0, %v2319
        %v2321 = vrot.slane %v2316, %v2320
        %vm2323 = vcmask 523264
        %v2325 = vsel %vm2323, %v2304, 0
        %v2328 = vsel %vm2323, %v2305, 0
        %v2331 = vsel %vm2323, %v2306, 0
        %v2334 = vsel %vm2323, %v2307, 0
        %2336 = vmatprep.subr.mxu0 0.0
        %2337 = vmatpush1.msra.mxu0 %v2308
        %2338 = vmatprep.subr.mxu0 0.0
        %2339 = vmatpush1.msra.mxu0 %v2309
        %2340 = vmatprep.subr.mxu0 0.0
        %2341 = vmatpush1.msra.mxu0 %v2310
        %2342 = vmatprep.subr.mxu0 0.0
        %2343 = vmatpush1.msra.mxu0 %v2311
        %2344 = vmatprep.subr.mxu0 0.0
        %2345 = vmatpush1.msra.mxu0 %v2312
        %2346 = vmatprep.subr.mxu0 0.0
        %2347 = vmatpush1.msra.mxu0 %v2313
        %2348 = vmatprep.subr.mxu0 0.0
        %2349 = vmatpush1.msra.mxu0 %v2314
        %2350 = vmatprep.subr.mxu0 0.0
        %2351 = vmatpush1.msra.mxu0 %v2315
        %2352 = vmatprep.subr.mxu0 0.0
        %2353 = vmatpush1.msra.mxu0 0.0
        %2354 = vmatprep.subr.mxu0 0.0
        %2355 = vmatpush1.msra.mxu0 0.0
        %2356 = vmatprep.subr.mxu0 0.0
        %2357 = vmatpush1.msra.mxu0 0.0
        %2358 = vmatprep.subr.mxu0 0.0
        %2359 = vmatpush1.msra.mxu0 0.0
        %2360 = vmatprep.subr.mxu0 0.0
        %2361 = vmatpush1.msra.mxu0 0.0
        %2362 = vmatprep.subr.mxu0 0.0
        %2363 = vmatpush1.msra.mxu0 0.0
        %2364 = vmatprep.subr.mxu0 0.0
        %2365 = vmatpush1.msra.mxu0 0.0
        %2366 = vmatprep.subr.mxu0 0.0
        %2367 = vmatpush1.msra.mxu0 0.0
        %2368 = vmatprep.subr.mxu0 0.0
        %2369 = vmatpush1.msra.mxu0 0.0
        %2370 = vmatprep.subr.mxu0 0.0
        %2371 = vmatpush1.msra.mxu0 0.0
        %2372 = vmatprep.subr.mxu0 0.0
        %2373 = vmatpush1.msra.mxu0 0.0
        %2374 = vmatprep.subr.mxu0 0.0
        %2375 = vmatpush1.msra.mxu0 0.0
        %2376 = vmatprep.subr.mxu0 0.0
        %2377 = vmatpush1.msra.mxu0 0.0
        %2378 = vmatprep.subr.mxu0 0.0
        %2379 = vmatpush1.msra.mxu0 0.0
        %2380 = vmatprep.subr.mxu0 0.0
        %2381 = vmatpush1.msra.mxu0 0.0
        %2382 = vmatprep.subr.mxu0 0.0
        %2383 = vmatpush1.msra.mxu0 0.0
        %2384 = vmatprep.subr.mxu0 0.0
        %2385 = vmatpush1.msra.mxu0 0.0
        %2386 = vmatprep.subr.mxu0 0.0
        %2387 = vmatpush1.msra.mxu0 0.0
        %2388 = vmatprep.subr.mxu0 0.0
        %2389 = vmatpush1.msra.mxu0 0.0
        %2390 = vmatprep.subr.mxu0 0.0
        %2391 = vmatpush1.msra.mxu0 0.0
        %2392 = vmatprep.subr.mxu0 0.0
        %2393 = vmatpush1.msra.mxu0 0.0
        %2394 = vmatprep.subr.mxu0 0.0
        %2395 = vmatpush1.msra.mxu0 0.0
        %2396 = vmatprep.subr.mxu0 0.0
        %2397 = vmatpush1.msra.mxu0 0.0
        %2398 = vmatprep.subr.mxu0 0.0
        %2399 = vmatpush1.msra.mxu0 0.0
        %2400 = vmatprep.mubr.f32.mxu0 0.0
        %2401 = vmatmul.mubr.f32.gmra.mrb[0].mxu0 %v2325
        %v2402 = vpop.f32.mrb[0].mxu0
        %v2403 = vadd.f32 %v2321, %v2402
        %v2404 = vpop.f32.mrb[0].mxu0
        %2405 = vmatprep.mubr.f32.mxu0 0.0
        %2406 = vmatmul.mubr.f32.gmra.mrb[0].mxu0 %v2328
        %v2407 = vpop.f32.mrb[0].mxu0
        %v2408 = vadd.f32 %v2321, %v2407
        %v2409 = vpop.f32.mrb[0].mxu0
        %2410 = vmatprep.mubr.f32.mxu0 0.0
        %2411 = vmatmul.mubr.f32.gmra.mrb[0].mxu0 %v2331
        %v2412 = vpop.f32.mrb[0].mxu0
        %v2413 = vadd.f32 %v2321, %v2412
        %v2414 = vpop.f32.mrb[0].mxu0
        %2415 = vmatprep.mubr.f32.mxu0 0.0
        %2416 = vmatmul.mubr.f32.gmra.mrb[0].mxu0 %v2334
        %v2417 = vpop.f32.mrb[0].mxu0
        %v2418 = vadd.f32 %v2321, %v2417
        %v2419 = vpop.f32.mrb[0].mxu0
        %2420 = vdwg.mxu0
        %v2421 = vadd.f32 %v2403, %v2192
        %v2422 = vadd.f32 %v2408, %v2193
        %v2423 = vadd.f32 %v2413, %v2194
        %v2424 = vadd.f32 %v2418, %v2195
        %v2425 = vld [vmem:[%s825] sm:$0x1]
        %v2426 = vld [vmem:[%s828] sm:$0x1]
        %v2427 = vsel %vm862, %v2421, 0.0
        %2428 = vadd.xlane.f32.xlu0 %v2427
        %v2429 = vpop.xlane.xlu0 %2428
        %v2430 = vsel %vm862, %v2422, 0.0
        %2431 = vadd.xlane.f32.xlu0 %v2430
        %v2432 = vpop.xlane.xlu0 %2431
        %v2433 = vsel %vm862, %v2423, 0.0
        %2434 = vadd.xlane.f32.xlu0 %v2433
        %v2435 = vpop.xlane.xlu0 %2434
        %v2436 = vsel %vm862, %v2424, 0.0
        %2437 = vadd.xlane.f32.xlu0 %v2436
        %v2438 = vpop.xlane.xlu0 %2437
        %v2439 = vmul.f32 %v2429, %v2111
        %v2440 = vmul.f32 %v2432, %v2111
        %v2441 = vmul.f32 %v2435, %v2111
        %v2442 = vmul.f32 %v2438, %v2111
        %v2443 = vsub.f32 %v2421, %v2439
        %v2444 = vsub.f32 %v2422, %v2440
        %v2445 = vsub.f32 %v2423, %v2441
        %v2446 = vsub.f32 %v2424, %v2442
        %v2447 = vmul.f32 %v2443, %v2443
        %v2448 = vmul.f32 %v2444, %v2444
        %v2449 = vmul.f32 %v2445, %v2445
        %v2450 = vmul.f32 %v2446, %v2446
        %v2451 = vsel %vm862, %v2447, 0.0
        %2452 = vadd.xlane.f32.xlu0 %v2451
        %v2453 = vpop.xlane.xlu0 %2452
        %v2454 = vsel %vm862, %v2448, 0.0
        %2455 = vadd.xlane.f32.xlu0 %v2454
        %v2456 = vpop.xlane.xlu0 %2455
        %v2457 = vsel %vm862, %v2449, 0.0
        %2458 = vadd.xlane.f32.xlu0 %v2457
        %v2459 = vpop.xlane.xlu0 %2458
        %v2460 = vsel %vm862, %v2450, 0.0
        %2461 = vadd.xlane.f32.xlu0 %v2460
        %v2462 = vpop.xlane.xlu0 %2461
        %v2463 = vmul.f32 %v2453, %v2111
        %v2464 = vmul.f32 %v2456, %v2111
        %v2465 = vmul.f32 %v2459, %v2111
        %v2466 = vmul.f32 %v2462, %v2111
        %v2467 = vadd.f32 %v2463, 1e-05
        %v2468 = vadd.f32 %v2464, 1e-05
        %v2469 = vadd.f32 %v2465, 1e-05
        %v2470 = vadd.f32 %v2466, 1e-05
        %v2471 = vrsqrt.pop %v2467
        %v2472 = vrsqrt.pop %v2468
        %v2473 = vrsqrt.pop %v2469
        %v2474 = vrsqrt.pop %v2470
        %v2475 = vmul.f32 %v2443, %v2471
        %v2476 = vmul.f32 %v2444, %v2472
        %v2477 = vmul.f32 %v2445, %v2473
        %v2478 = vmul.f32 %v2446, %v2474
        %v2480 = vlaneseq
        %v2481 = vshrl.u32 %v2480, 7
        %v2482 = vsub.s32 0, %v2481
        %v2483 = vrot.slane %v2425, %v2482
        %v2485 = vmul.f32 %v2475, %v2483
        %v2486 = vmul.f32 %v2476, %v2483
        %v2487 = vmul.f32 %v2477, %v2483
        %v2488 = vmul.f32 %v2478, %v2483
        %v2490 = vlaneseq
        %v2491 = vshrl.u32 %v2490, 7
        %v2492 = vsub.s32 0, %v2491
        %v2493 = vrot.slane %v2426, %v2492
        %v2495 = vadd.f32 %v2485, %v2493
        %v2496 = vadd.f32 %v2486, %v2493
        %v2497 = vadd.f32 %v2487, %v2493
        %v2498 = vadd.f32 %v2488, %v2493
        %v2499 = vmul.f32 %v2495, %v2175
        %v2500 = vmul.f32 %v2496, %v2180
        %v2501 = vmul.f32 %v2497, %v2185
        %v2502 = vmul.f32 %v2498, %v2190
        %2503 = vst.msk [vmem:[#allocation2] sm:$0xff] %vm862, %v2499
        %2504 = vst.msk [vmem:[#allocation2 + $0x8] sm:$0xff] %vm862, %v2500
        %2505 = vst.msk [vmem:[#allocation2 + $0x10] sm:$0xff] %vm862, %v2501
        %2506 = vst.msk [vmem:[#allocation2 + $0x18] sm:$0xff] %vm862, %v2502
        // Predicated region
        $region101: #{encoder_forward.1} parent=95 // pred_check
          %p2507 = pneg %p523
        $region102: #{encoder_forward.1} parent=95 // pred_check_branch
          %2509 = sbr.rel (%p2507) target = $region104
        $region103: #{encoder_forward.1} parent=95 // pred_region
          %s2511 = ssub.s32 512, 512
          %2512 = vsyncadd [#allocation3], %s2511
          %s2513 = sshll.u32 [#allocation2], 4
          %s2514 = int_to_ptr.vmem [resolvable:$true] %s2513
          %2519 = dma.vmem_to_hbm [thread:$0]  %s2514, 512, %s19, [#allocation3], 128, 128, 8
        $region104: #{encoder_forward.1} parent=95 // pred_fallthru
          _
        // Predicated region
        $region105: #{encoder_forward.1} parent=95 // pred_check
          %p2520 = pneg %p523
        $region106: #{encoder_forward.1} parent=95 // pred_check_branch
          %2522 = sbr.rel (%p2520) target = $region108
        $region107: #{encoder_forward.1} parent=95 // pred_region
          %2523 = dma.done [#allocation3], 512
        $region108: #{encoder_forward.1} parent=95 // pred_fallthru
          _
      $region96: #{encoder_forward.1} parent=5 // pred_fallthru
        _
      %p2524 = scmp.le.s32.totalorder 2, %s26
      // Predicated region
      $region109: #{encoder_forward.1} parent=5 // pred_check
        %p2525 = pneg %p2524
      $region110: #{encoder_forward.1} parent=5 // pred_check_branch
        %2527 = sbr.rel (%p2525) target = $region112
      $region111: #{encoder_forward.1} parent=5 // pred_region
        %s2528 = ssub.s32 %s26, 2
      $region112: #{encoder_forward.1} parent=5 // pred_fallthru
        _
    $region6: #{encoder_forward.1} parent=1 // loop_footer
      %s30 = sadd.s32 1, %s26
    $region7: #{encoder_forward.1} parent=1 // loop_footer_branch
      %25 = sbr.rel target = $region3
    $region8: #{encoder_forward.1} parent=1 // loop_exit
      _
    %2529 = vsyncpa [#allocation3], 1
    %s2530 = scalar_lea.sflag [#allocation3], 1
    %2531 = vsyncpa %s2530, 1

</llo_original>
